<compile_context>
chip_gen: v6e
topology: v6e:2x2x1
jax: 0.10.0
libtpu: 0.0.40
codegen_flags: <defaults>
</compile_context>

<pallas_src>
import functools
import math

import jax
import jax.numpy as jnp
from jax.experimental import pallas as pl
from jax.experimental.pallas import tpu as pltpu

LN_EPS = 1e-5
NEG_INF = -1e30
# Scoped-VMEM limit: leaves headroom under v7x's 64 MiB physical VMEM; raise
# toward ~100 MiB when targeting v5e/v6e (128 MiB physical) with bigger tiles.
_VMEM_LIMIT_BYTES = 48 * 1024 * 1024


# ---------------------------------------------------------------------------
# small math helpers (run on the VPU inside kernels, f32)
# ---------------------------------------------------------------------------
def _layernorm(z, g, b):
    mu = jnp.mean(z, axis=-1, keepdims=True)
    var = jnp.mean((z - mu) ** 2, axis=-1, keepdims=True)
    return (z - mu) * jax.lax.rsqrt(var + LN_EPS) * g + b


def _gelu(x):
    # tanh-approx GELU.  TODO(synk): PyTorch nn.GELU() default is the erf form.
    c = math.sqrt(2.0 / math.pi)
    return 0.5 * x * (1.0 + jnp.tanh(c * (x + 0.044715 * x * x * x)))


# ---------------------------------------------------------------------------
# tile-size selection (full-extent fallback keeps tiny/odd shapes legal)
# ---------------------------------------------------------------------------
def _row_tile(n):
    # token-row tiles: >=16 so bf16 outputs avoid sublane-masked partial stores
    for t in (512, 256, 128, 64, 32, 16):
        if t <= n and n % t == 0:
            return t
    return n


def _lane_tile(n):
    for t in (512, 256, 128):
        if t <= n and n % t == 0:
            return t
    return n


def _seq_tile(n):
    for t in (512, 256, 128):
        if t <= n and n % t == 0:
            return t
    return n


def _cparams(dimension_semantics):
    return pltpu.CompilerParams(dimension_semantics=dimension_semantics,
                                vmem_limit_bytes=_VMEM_LIMIT_BYTES)


# ---------------------------------------------------------------------------
# resident-weight BlockSpecs: single-buffered when the backend supports it
# ---------------------------------------------------------------------------
def _probe_copy_kernel(x_ref, o_ref):
    o_ref[...] = x_ref[...]


def _single_buffer_weights_supported():
    """Capability probe: pipeline_mode=pl.Buffered(1) on a constant-index input."""
    try:
        x = jnp.zeros((8, 128), jnp.float32)
        y = pl.pallas_call(
            _probe_copy_kernel,
            out_shape=jax.ShapeDtypeStruct((8, 128), jnp.float32),
            grid=(2,),
            in_specs=[pl.BlockSpec((8, 128), lambda i: (0, 0),
                                   pipeline_mode=pl.Buffered(1))],
            out_specs=pl.BlockSpec((8, 128), lambda i: (0, 0)),
        )(x)
        jax.block_until_ready(y)
        return True
    except Exception:
        return False


_SINGLE_BUFFER_WEIGHTS = _single_buffer_weights_supported()


def _weight_spec(shape):
    """Weight/bias spec: full block, resident across the grid, single-buffered."""
    nd = len(shape)
    index_map = lambda *_: (0,) * nd
    if _SINGLE_BUFFER_WEIGHTS:
        return pl.BlockSpec(shape, index_map, pipeline_mode=pl.Buffered(1))
    return pl.BlockSpec(shape, index_map)


# ---------------------------------------------------------------------------
# Pallas kernels
# ---------------------------------------------------------------------------
def _ln_qkv_kernel(x_ref, g_ref, b_ref, w_ref, bias_ref, qkv_ref):
    """Pre-LN + fused QKV projection on one (row tile, output-column tile)."""
    xn = _layernorm(x_ref[...], g_ref[...], b_ref[...])          # f32 [TM, D]
    y = jnp.dot(xn.astype(jnp.bfloat16), w_ref[...],
                preferred_element_type=jnp.float32) + bias_ref[...]
    qkv_ref[...] = y.astype(qkv_ref.dtype)


def _flash_attn_kernel(q_ref, k_ref, v_ref, o_ref, m_sc, l_sc, acc_sc,
                       *, scale, tq, tk):
    """Online-softmax causal attention for one (batch, head, q-tile, kv-tile)."""
    qi = pl.program_id(2)
    ki = pl.program_id(3)
    q_start = qi * tq
    k_start = ki * tk

    @pl.when(ki == 0)
    def _():
        m_sc[...] = jnp.full_like(m_sc, -jnp.inf)
        l_sc[...] = jnp.zeros_like(l_sc)
        acc_sc[...] = jnp.zeros_like(acc_sc)

    # Skip kv tiles that lie entirely above the causal diagonal.
    @pl.when(k_start <= q_start + (tq - 1))
    def _():
        s = jax.lax.dot_general(
            q_ref[...], k_ref[...], (((1,), (1,)), ((), ())),
            preferred_element_type=jnp.float32) * scale           # f32 [TQ, TK]
        # per-tile causal mask from tile offsets (O(TQ*TK), not O(L^2))
        row = q_start + jax.lax.broadcasted_iota(jnp.int32, (tq, tk), 0)
        col = k_start + jax.lax.broadcasted_iota(jnp.int32, (tq, tk), 1)
        s = jnp.where(row >= col, s, NEG_INF)

        m_prev = m_sc[...]
        m_new = jnp.maximum(m_prev, jnp.max(s, axis=-1, keepdims=True))
        alpha = jnp.exp(m_prev - m_new)
        p = jnp.exp(s - m_new)
        l_sc[...] = alpha * l_sc[...] + jnp.sum(p, axis=-1, keepdims=True)
        acc_sc[...] = alpha * acc_sc[...] + jnp.dot(
            p.astype(v_ref.dtype), v_ref[...],
            preferred_element_type=jnp.float32)
        m_sc[...] = m_new

    @pl.when(ki == pl.num_programs(3) - 1)
    def _():
        o_ref[...] = (acc_sc[...] *
                      pl.reciprocal(l_sc[...], approx=True)).astype(o_ref.dtype)


def _attn_out_ffn_kernel(x_ref, a_ref, wo_ref, bo_ref, g2_ref, b2_ref,
                         w1_ref, b1_ref, w2_ref, b2out_ref, o_ref,
                         xres_sc, xn_sc, acc_sc):
    """attn out-proj + residual + pre-LN GELU MLP (F-tiled) + residual."""
    f = pl.program_id(1)

    @pl.when(f == 0)
    def _():
        # TODO(synk): for very large D split the wo projection into its own
        # K-tiled kernel instead of keeping wo [D, D] resident.
        x = x_ref[...] + (jnp.dot(a_ref[...], wo_ref[...],
                                  preferred_element_type=jnp.float32)
                          + bo_ref[...])
        xres_sc[...] = x                                           # residual 1
        xn_sc[...] = _layernorm(x, g2_ref[...], b2_ref[...]).astype(jnp.bfloat16)
        acc_sc[...] = jnp.zeros_like(acc_sc)
        # TODO(synk): dropout omitted (inference mode => identity).

    # one F-stripe of the MLP: gelu(xn @ w1[:, f]) @ w2[f, :]
    h = _gelu(jnp.dot(xn_sc[...], w1_ref[...],
                      preferred_element_type=jnp.float32) + b1_ref[...])
    acc_sc[...] += jnp.dot(h.astype(jnp.bfloat16), w2_ref[...],
                           preferred_element_type=jnp.float32)

    @pl.when(f == pl.num_programs(1) - 1)
    def _():
        o_ref[...] = xres_sc[...] + acc_sc[...] + b2out_ref[...]   # residual 2


def _final_ln_lm_head_kernel(x_ref, g_ref, b_ref, w_ref, bo_ref, o_ref,
                             xn_sc, acc_sc, *, tk, nk):
    """Final LayerNorm fused into a K-blocked, vocab-tiled LM-head matmul."""
    j = pl.program_id(1)   # vocab tile
    k = pl.program_id(2)   # reduction (embed-dim) tile

    # LN once per row tile; the vocab axis is "arbitrary" (not megacore-
    # sharded) so the j==0 gate is safe and the cached LN is reused for all j.
    @pl.when(jnp.logical_and(j == 0, k == 0))
    def _():
        xn = _layernorm(x_ref[...], g_ref[...], b_ref[...]).astype(jnp.bfloat16)
        for kk in range(nk):                     # static unroll into K stripes
            xn_sc[kk] = xn[:, kk * tk:(kk + 1) * tk]

    @pl.when(k == 0)
    def _():
        acc_sc[...] = jnp.zeros_like(acc_sc)

    acc_sc[...] += jnp.dot(xn_sc[k], w_ref[...],
                           preferred_element_type=jnp.float32)

    @pl.when(k == pl.num_programs(2) - 1)
    def _():
        o_ref[...] = (acc_sc[...] + bo_ref[...]).astype(o_ref.dtype)


# ---------------------------------------------------------------------------
# pallas_call wrappers
# ---------------------------------------------------------------------------
def run_ln_qkv(x2d, p):
    M, D = x2d.shape
    D3 = p["w_qkv"].shape[-1]
    TM, TN = _row_tile(M), _lane_tile(D3)
    return pl.pallas_call(
        _ln_qkv_kernel,
        out_shape=jax.ShapeDtypeStruct((M, D3), jnp.bfloat16),
        grid=(M // TM, D3 // TN),
        in_specs=[pl.BlockSpec((TM, D), lambda i, j: (i, 0)),
                  _weight_spec(p["ln1_g"].shape),
                  _weight_spec(p["ln1_b"].shape),
                  pl.BlockSpec((D, TN), lambda i, j: (0, j)),
                  pl.BlockSpec((1, TN), lambda i, j: (0, j))],
        out_specs=pl.BlockSpec((TM, TN), lambda i, j: (i, j)),
        compiler_params=_cparams(("parallel", "parallel")),
    )(x2d, p["ln1_g"], p["ln1_b"], p["w_qkv"], p["b_qkv"])


def run_flash_attention(q4, k4, v4, scale):
    B, H, L, Dh = q4.shape
    TQ = _seq_tile(L)
    TK = _seq_tile(L)
    q_spec = pl.BlockSpec((None, None, TQ, Dh),
                          lambda b, h, qi, ki: (b, h, qi, 0))
    kv_spec = pl.BlockSpec((None, None, TK, Dh),
                           lambda b, h, qi, ki: (b, h, ki, 0))
    kernel = functools.partial(_flash_attn_kernel, scale=scale, tq=TQ, tk=TK)
    return pl.pallas_call(
        kernel,
        out_shape=jax.ShapeDtypeStruct((B, H, L, Dh), jnp.bfloat16),
        grid=(B, H, L // TQ, L // TK),
        in_specs=[q_spec, kv_spec, kv_spec],
        out_specs=q_spec,
        scratch_shapes=[pltpu.VMEM((TQ, 1), jnp.float32),
                        pltpu.VMEM((TQ, 1), jnp.float32),
                        pltpu.VMEM((TQ, Dh), jnp.float32)],
        compiler_params=_cparams(
            ("parallel", "parallel", "parallel", "arbitrary")),
    )(q4, k4, v4)


def run_attn_out_ffn(x2d, attn2d, p):
    M, D = x2d.shape
    F = p["w1"].shape[-1]
    TM, TF = _row_tile(M), _lane_tile(F)
    row = lambda i, f: (i, 0)
    return pl.pallas_call(
        _attn_out_ffn_kernel,
        out_shape=jax.ShapeDtypeStruct((M, D), jnp.float32),
        grid=(M // TM, F // TF),
        in_specs=[pl.BlockSpec((TM, D), row),
                  pl.BlockSpec((TM, D), row),
                  _weight_spec(p["wo"].shape),
                  _weight_spec(p["bo"].shape),
                  _weight_spec(p["ln2_g"].shape),
                  _weight_spec(p["ln2_b"].shape),
                  pl.BlockSpec((D, TF), lambda i, f: (0, f)),
                  pl.BlockSpec((1, TF), lambda i, f: (0, f)),
                  pl.BlockSpec((TF, D), lambda i, f: (f, 0)),
                  _weight_spec(p["b2"].shape)],
        out_specs=pl.BlockSpec((TM, D), row),
        scratch_shapes=[pltpu.VMEM((TM, D), jnp.float32),    # residual cache
                        pltpu.VMEM((TM, D), jnp.bfloat16),   # LN(x) cache
                        pltpu.VMEM((TM, D), jnp.float32)],   # FFN accumulator
        input_output_aliases={0: 0},   # residual output reuses x's HBM buffer
        compiler_params=_cparams(("parallel", "arbitrary")),
    )(x2d, attn2d, p["wo"], p["bo"], p["ln2_g"], p["ln2_b"],
      p["w1"], p["b1"], p["w2"], p["b2"])


def run_lm_head(x2d, g, b, w_out, b_out):
    M, D = x2d.shape
    V = w_out.shape[-1]
    TM, TN, TK = _row_tile(M), _lane_tile(V), _lane_tile(D)
    nk = D // TK
    kernel = functools.partial(_final_ln_lm_head_kernel, tk=TK, nk=nk)
    return pl.pallas_call(
        kernel,
        out_shape=jax.ShapeDtypeStruct((M, V), jnp.float32),
        grid=(M // TM, V // TN, nk),
        in_specs=[pl.BlockSpec((TM, D), lambda i, j, k: (i, 0)),
                  _weight_spec(g.shape),
                  _weight_spec(b.shape),
                  pl.BlockSpec((TK, TN), lambda i, j, k: (k, j)),
                  pl.BlockSpec((1, TN), lambda i, j, k: (0, j))],
        out_specs=pl.BlockSpec((TM, TN), lambda i, j, k: (i, j)),
        scratch_shapes=[pltpu.VMEM((nk, TM, TK), jnp.bfloat16),
                        pltpu.VMEM((TM, TN), jnp.float32)],
        compiler_params=_cparams(("parallel", "arbitrary", "arbitrary")),
    )(x2d, g, b, w_out, b_out)


# ---------------------------------------------------------------------------
# Parameter / buffer construction (deterministic, synthetic)
# ---------------------------------------------------------------------------
def get_positional_encoding(max_len, d):
    pos = jnp.arange(max_len, dtype=jnp.float32)[:, None]
    div = jnp.exp(jnp.arange(0, d, 2, dtype=jnp.float32)
                  * (-math.log(10000.0) / d))
    pe = jnp.zeros((max_len, d), dtype=jnp.float32)
    pe = pe.at[:, 0::2].set(jnp.sin(pos * div))
    pe = pe.at[:, 1::2].set(jnp.cos(pos * div))
    return pe


def init_params(key, vocab, D, F, layers):
    def normal_bf16(k, shape, scale=0.02):
        # weights stored bf16 (MXU inputs); accumulation stays f32 in-kernel
        return (scale * jax.random.normal(k, shape, dtype=jnp.float32)
                ).astype(jnp.bfloat16)

    keys = jax.random.split(key, 2 + layers)
    params = {"embed": 0.02 * jax.random.normal(keys[0], (vocab, D),
                                                dtype=jnp.float32)}
    blocks = []
    for l in range(layers):
        ks = jax.random.split(keys[2 + l], 4)
        blocks.append({
            "ln1_g": jnp.ones((1, D), jnp.float32),
            "ln1_b": jnp.zeros((1, D), jnp.float32),
            # fused [q | k | v] projection
            "w_qkv": normal_bf16(ks[0], (D, 3 * D)),
            "b_qkv": jnp.zeros((1, 3 * D), jnp.float32),
            "wo": normal_bf16(ks[1], (D, D)), "bo": jnp.zeros((1, D), jnp.float32),
            "ln2_g": jnp.ones((1, D), jnp.float32),
            "ln2_b": jnp.zeros((1, D), jnp.float32),
            "w1": normal_bf16(ks[2], (D, F)), "b1": jnp.zeros((1, F), jnp.float32),
            "w2": normal_bf16(ks[3], (F, D)), "b2": jnp.zeros((1, D), jnp.float32),
        })
    params["blocks"] = blocks
    params["lnf_g"] = jnp.ones((1, D), jnp.float32)
    params["lnf_b"] = jnp.zeros((1, D), jnp.float32)
    params["w_out"] = normal_bf16(keys[1], (D, vocab))
    params["b_out"] = jnp.zeros((1, vocab), jnp.float32)
    return params


# ---------------------------------------------------------------------------
# Full forward pass
# ---------------------------------------------------------------------------
@functools.partial(jax.jit, static_argnums=3)
def gpt_forward(token_ids, params, pos_enc, num_heads):
    B, L = token_ids.shape
    D = params["embed"].shape[-1]
    H = num_heads
    Dh = D // H
    assert L <= pos_enc.shape[0], "Input sequence length exceeds max_seq_len"

    # embedding gather + positional add: plain-JAX glue
    tok_emb = jnp.take(params["embed"], token_ids, axis=0)           # [B, L, D]
    x2d = (tok_emb + pos_enc[:L][None]).reshape(B * L, D).astype(jnp.float32)

    scale = 1.0 / math.sqrt(Dh)
    for bp in params["blocks"]:
        qkv = run_ln_qkv(x2d, bp)                                    # [M,3D] bf16
        # single merged head-split transpose for q/k/v, one inverse afterwards
        # TODO(synk): for Dh >= 128 fold the [B, L, H, Dh] layout into the
        # attention BlockSpecs and drop these transposes entirely.
        qkv = qkv.reshape(B, L, 3, H, Dh).transpose(2, 0, 3, 1, 4)   # [3,B,H,L,Dh]
        o4 = run_flash_attention(qkv[0], qkv[1], qkv[2], scale)      # [B,H,L,Dh]
        attn2d = o4.transpose(0, 2, 1, 3).reshape(B * L, D)          # [M, D] bf16
        x2d = run_attn_out_ffn(x2d, attn2d, bp)                      # [M, D] f32

    logits2d = run_lm_head(x2d, params["lnf_g"], params["lnf_b"],
                           params["w_out"], params["b_out"])         # [M, V]
    return logits2d.reshape(B, L, -1)


if __name__ == "__main__":
    vocab_size, embed_dim, num_heads = 64, 32, 4
    ff_hidden_dim, num_layers, max_seq_len = 64, 2, 16
    B, L = 2, 8

    key = jax.random.PRNGKey(0)
    kp, kx = jax.random.split(key)
    params = init_params(kp, vocab_size, embed_dim, ff_hidden_dim, num_layers)
    pos_enc = get_positional_encoding(max_seq_len, embed_dim)
    token_ids = jax.random.randint(kx, (B, L), 0, vocab_size, dtype=jnp.int32)

    logits = gpt_forward(token_ids, params, pos_enc, num_heads)
    jax.block_until_ready(logits)
    assert logits.shape == (B, L, vocab_size)
    assert bool(jnp.all(jnp.isfinite(logits)))
    print("KERNEL_OK")
</pallas_src>

<mosaic_0001>
module attributes {stable_mosaic.version = 11 : i64} {
  func.func @_probe_copy_kernel(%arg0: i32, %arg1: memref<8x128xf32, #tpu.memory_space<vmem>>, %arg2: memref<8x128xf32, #tpu.memory_space<vmem>>) attributes {dimension_semantics = [#tpu.dimension_semantics<arbitrary>], iteration_bounds = array<i64: 2>, scalar_prefetch = 0 : i64, scratch_operands = 0 : i64, tpu.core_type = #tpu.core_type<tc>, window_params = [{pipeline_mode = #tpu.pipeline_mode<synchronous>, transform_indices = @transform_0, window_bounds = array<i64: 8, 128>}, {pipeline_mode = #tpu.pipeline_mode<synchronous>, transform_indices = @transform_1, window_bounds = array<i64: 8, 128>}]} {
    %c0 = arith.constant 0 : index
    %c0_0 = arith.constant 0 : index
    %0 = vector.load %arg1[%c0, %c0_0] : memref<8x128xf32, #tpu.memory_space<vmem>>, vector<8x128xf32>
    %c0_1 = arith.constant 0 : index
    %c0_2 = arith.constant 0 : index
    %1 = vector.load %arg2[%c0_1, %c0_2] : memref<8x128xf32, #tpu.memory_space<vmem>>, vector<8x128xf32>
    tpu.vector_store %arg2[%c0_1, %c0_2], %0 {strides = array<i32>} : memref<8x128xf32, #tpu.memory_space<vmem>>, vector<8x128xf32>,
    return
  }
  func.func @transform_0(%arg0: i32) -> (i32, i32) {
    %c0_i32 = arith.constant 0 : i32
    %c0_i32_0 = arith.constant 0 : i32
    %c0_i32_1 = arith.constant 0 : i32
    return %c0_i32, %c0_i32_0 : i32, i32
  }
  func.func @transform_1(%arg0: i32) -> (i32, i32) {
    %c0_i32 = arith.constant 0 : i32
    %c0_i32_0 = arith.constant 0 : i32
    %c0_i32_1 = arith.constant 0 : i32
    return %c0_i32, %c0_i32_0 : i32, i32
  }
}

module attributes {stable_mosaic.version = 11 : i64} {
  func.func @_ln_qkv_kernel(%arg0: i32, %arg1: i32, %arg2: memref<16x32xf32, #tpu.memory_space<vmem>>, %arg3: memref<1x32xf32, #tpu.memory_space<vmem>>, %arg4: memref<1x32xf32, #tpu.memory_space<vmem>>, %arg5: memref<32x96xbf16, #tpu.memory_space<vmem>>, %arg6: memref<1x96xf32, #tpu.memory_space<vmem>>, %arg7: memref<16x96xbf16, #tpu.memory_space<vmem>>) attributes {dimension_semantics = [#tpu.dimension_semantics<parallel>, #tpu.dimension_semantics<parallel>], iteration_bounds = array<i64: 1, 1>, scalar_prefetch = 0 : i64, scratch_operands = 0 : i64, tpu.core_type = #tpu.core_type<tc>, window_params = [{transform_indices = @transform_0, window_bounds = array<i64: 16, 32>}, {pipeline_mode = #tpu.pipeline_mode<synchronous>, transform_indices = @transform_1, window_bounds = array<i64: 1, 32>}, {pipeline_mode = #tpu.pipeline_mode<synchronous>, transform_indices = @transform_2, window_bounds = array<i64: 1, 32>}, {transform_indices = @transform_3, window_bounds = array<i64: 32, 96>}, {transform_indices = @transform_4, window_bounds = array<i64: 1, 96>}, {transform_indices = @transform_5, window_bounds = array<i64: 16, 96>}]} {
    %c0 = arith.constant 0 : index
    %c0_0 = arith.constant 0 : index
    %0 = vector.load %arg2[%c0, %c0_0] : memref<16x32xf32, #tpu.memory_space<vmem>>, vector<16x32xf32>
    %c0_1 = arith.constant 0 : index
    %c0_2 = arith.constant 0 : index
    %1 = vector.load %arg3[%c0_1, %c0_2] : memref<1x32xf32, #tpu.memory_space<vmem>>, vector<1x32xf32>
    %c0_3 = arith.constant 0 : index
    %c0_4 = arith.constant 0 : index
    %2 = vector.load %arg4[%c0_3, %c0_4] : memref<1x32xf32, #tpu.memory_space<vmem>>, vector<1x32xf32>
    %cst = arith.constant dense<0.000000e+00> : vector<16xf32>
    %3 = vector.multi_reduction <add>, %0, %cst [1] : vector<16x32xf32> to vector<16xf32>
    %4 = vector.shape_cast %3 : vector<16xf32> to vector<16x1xf32>
    %cst_5 = arith.constant 3.200000e+01 : f32
    %5 = vector.broadcast %cst_5 : f32 to vector<16x1xf32>
    %6 = arith.divf %4, %5 : vector<16x1xf32>
    %7 = vector.broadcast %6 : vector<16x1xf32> to vector<16x32xf32>
    %8 = arith.subf %0, %7 : vector<16x32xf32>
    %9 = arith.mulf %8, %8 : vector<16x32xf32>
    %cst_6 = arith.constant dense<0.000000e+00> : vector<16xf32>
    %10 = vector.multi_reduction <add>, %9, %cst_6 [1] : vector<16x32xf32> to vector<16xf32>
    %11 = vector.shape_cast %10 : vector<16xf32> to vector<16x1xf32>
    %cst_7 = arith.constant 3.200000e+01 : f32
    %12 = vector.broadcast %cst_7 : f32 to vector<16x1xf32>
    %13 = arith.divf %11, %12 : vector<16x1xf32>
    %14 = vector.broadcast %6 : vector<16x1xf32> to vector<16x32xf32>
    %15 = arith.subf %0, %14 : vector<16x32xf32>
    %cst_8 = arith.constant 9.99999974E-6 : f32
    %16 = vector.broadcast %cst_8 : f32 to vector<16x1xf32>
    %17 = arith.addf %13, %16 : vector<16x1xf32>
    %18 = math.rsqrt %17 : vector<16x1xf32>
    %19 = vector.broadcast %18 : vector<16x1xf32> to vector<16x32xf32>
    %20 = arith.mulf %15, %19 : vector<16x32xf32>
    %21 = vector.broadcast %1 : vector<1x32xf32> to vector<16x32xf32>
    %22 = arith.mulf %20, %21 : vector<16x32xf32>
    %23 = vector.broadcast %2 : vector<1x32xf32> to vector<16x32xf32>
    %24 = arith.addf %22, %23 : vector<16x32xf32>
    %25 = arith.truncf %24 : vector<16x32xf32> to vector<16x32xbf16>
    %c0_9 = arith.constant 0 : index
    %c0_10 = arith.constant 0 : index
    %26 = vector.load %arg5[%c0_9, %c0_10] : memref<32x96xbf16, #tpu.memory_space<vmem>>, vector<32x96xbf16>
    %cst_11 = arith.constant dense<0.000000e+00> : vector<16x96xf32>
    %27 = tpu.matmul %25, %26, %cst_11 {dimension_numbers = #tpu.dot_dimension_numbers<[1], [0], [0], [1], [0, 0, 1, 1], [], []>} : vector<16x32xbf16>, vector<32x96xbf16>, vector<16x96xf32> -> vector<16x96xf32>
    %c0_12 = arith.constant 0 : index
    %c0_13 = arith.constant 0 : index
    %28 = vector.load %arg6[%c0_12, %c0_13] : memref<1x96xf32, #tpu.memory_space<vmem>>, vector<1x96xf32>
    %29 = vector.broadcast %28 : vector<1x96xf32> to vector<16x96xf32>
    %30 = arith.addf %27, %29 : vector<16x96xf32>
    %31 = arith.truncf %30 : vector<16x96xf32> to vector<16x96xbf16>
    %c0_14 = arith.constant 0 : index
    %c0_15 = arith.constant 0 : index
    %32 = vector.load %arg7[%c0_14, %c0_15] : memref<16x96xbf16, #tpu.memory_space<vmem>>, vector<16x96xbf16>
    tpu.vector_store %arg7[%c0_14, %c0_15], %31 {strides = array<i32>} : memref<16x96xbf16, #tpu.memory_space<vmem>>, vector<16x96xbf16>,
    return
  }
  func.func @transform_0(%arg0: i32, %arg1: i32) -> (i32, i32) {
    %c0_i32 = arith.constant 0 : i32
    %c0_i32_0 = arith.constant 0 : i32
    return %arg0, %c0_i32 : i32, i32
  }
  func.func @transform_1(%arg0: i32, %arg1: i32) -> (i32, i32) {
    %c0_i32 = arith.constant 0 : i32
    %c0_i32_0 = arith.constant 0 : i32
    %c0_i32_1 = arith.constant 0 : i32
    return %c0_i32, %c0_i32_0 : i32, i32
  }
  func.func @transform_2(%arg0: i32, %arg1: i32) -> (i32, i32) {
    %c0_i32 = arith.constant 0 : i32
    %c0_i32_0 = arith.constant 0 : i32
    %c0_i32_1 = arith.constant 0 : i32
    return %c0_i32, %c0_i32_0 : i32, i32
  }
  func.func @transform_3(%arg0: i32, %arg1: i32) -> (i32, i32) {
    %c0_i32 = arith.constant 0 : i32
    %c0_i32_0 = arith.constant 0 : i32
    return %c0_i32, %arg1 : i32, i32
  }
  func.func @transform_4(%arg0: i32, %arg1: i32) -> (i32, i32) {
    %c0_i32 = arith.constant 0 : i32
    %c0_i32_0 = arith.constant 0 : i32
    return %c0_i32, %arg1 : i32, i32
  }
  func.func @transform_5(%arg0: i32, %arg1: i32) -> (i32, i32) {
    %c0_i32 = arith.constant 0 : i32
    return %arg0, %arg1 : i32, i32
  }
}

module attributes {stable_mosaic.version = 11 : i64} {
  func.func @_flash_attn_kernel(%arg0: i32, %arg1: i32, %arg2: i32, %arg3: i32, %arg4: memref<1x1x8x8xbf16, #tpu.memory_space<vmem>>, %arg5: memref<1x1x8x8xbf16, #tpu.memory_space<vmem>>, %arg6: memref<1x1x8x8xbf16, #tpu.memory_space<vmem>>, %arg7: memref<1x1x8x8xbf16, #tpu.memory_space<vmem>>, %arg8: memref<8x1xf32, #tpu.memory_space<vmem>>, %arg9: memref<8x1xf32, #tpu.memory_space<vmem>>, %arg10: memref<8x8xf32, #tpu.memory_space<vmem>>) attributes {dimension_semantics = [#tpu.dimension_semantics<parallel>, #tpu.dimension_semantics<parallel>, #tpu.dimension_semantics<parallel>, #tpu.dimension_semantics<arbitrary>], iteration_bounds = array<i64: 2, 4, 1, 1>, scalar_prefetch = 0 : i64, scratch_operands = 3 : i64, tpu.core_type = #tpu.core_type<tc>, window_params = [{transform_indices = @transform_0, window_bounds = array<i64: 1, 1, 8, 8>}, {transform_indices = @transform_1, window_bounds = array<i64: 1, 1, 8, 8>}, {transform_indices = @transform_2, window_bounds = array<i64: 1, 1, 8, 8>}, {transform_indices = @transform_3, window_bounds = array<i64: 1, 1, 8, 8>}]} {
    %c8_i32 = arith.constant 8 : i32
    %0 = arith.muli %arg2, %c8_i32 : i32
    %c8_i32_0 = arith.constant 8 : i32
    %1 = arith.muli %arg3, %c8_i32_0 : i32
    %c0_i32 = arith.constant 0 : i32
    %2 = arith.cmpi eq, %arg3, %c0_i32 : i32
    %3 = arith.extui %2 : i1 to i32
    %c0_i32_1 = arith.constant 0 : i32
    %4 = arith.cmpi ne, %3, %c0_i32_1 : i32
    scf.if %4 {
      %cst = arith.constant 0xFF800000 : f32
      %12 = vector.broadcast %cst : f32 to vector<8x1xf32>
      %c0 = arith.constant 0 : index
      %c0_5 = arith.constant 0 : index
      %13 = vector.load %arg8[%c0, %c0_5] : memref<8x1xf32, #tpu.memory_space<vmem>>, vector<8x1xf32>
      tpu.vector_store %arg8[%c0, %c0_5], %12 {strides = array<i32>} : memref<8x1xf32, #tpu.memory_space<vmem>>, vector<8x1xf32>,
      %cst_6 = arith.constant 0.000000e+00 : f32
      %14 = vector.broadcast %cst_6 : f32 to vector<8x1xf32>
      %c0_7 = arith.constant 0 : index
      %c0_8 = arith.constant 0 : index
      %15 = vector.load %arg9[%c0_7, %c0_8] : memref<8x1xf32, #tpu.memory_space<vmem>>, vector<8x1xf32>
      tpu.vector_store %arg9[%c0_7, %c0_8], %14 {strides = array<i32>} : memref<8x1xf32, #tpu.memory_space<vmem>>, vector<8x1xf32>,
      %cst_9 = arith.constant 0.000000e+00 : f32
      %16 = vector.broadcast %cst_9 : f32 to vector<8x8xf32>
      %c0_10 = arith.constant 0 : index
      %c0_11 = arith.constant 0 : index
      %17 = vector.load %arg10[%c0_10, %c0_11] : memref<8x8xf32, #tpu.memory_space<vmem>>, vector<8x8xf32>
      tpu.vector_store %arg10[%c0_10, %c0_11], %16 {strides = array<i32>} : memref<8x8xf32, #tpu.memory_space<vmem>>, vector<8x8xf32>,
    } else {
    }
    %c7_i32 = arith.constant 7 : i32
    %5 = arith.addi %0, %c7_i32 : i32
    %6 = arith.cmpi sle, %1, %5 : i32
    %7 = arith.extui %6 : i1 to i32
    %c0_i32_2 = arith.constant 0 : i32
    %8 = arith.cmpi ne, %7, %c0_i32_2 : i32
    scf.if %8 {
      %c0 = arith.constant 0 : index
      %c0_5 = arith.constant 0 : index
      %c0_6 = arith.constant 0 : index
      %c0_7 = arith.constant 0 : index
      %12 = vector.load %arg4[%c0, %c0_5, %c0_6, %c0_7] : memref<1x1x8x8xbf16, #tpu.memory_space<vmem>>, vector<1x1x8x8xbf16>
      %13 = vector.shape_cast %12 : vector<1x1x8x8xbf16> to vector<8x8xbf16>
      %c0_8 = arith.constant 0 : index
      %c0_9 = arith.constant 0 : index
      %c0_10 = arith.constant 0 : index
      %c0_11 = arith.constant 0 : index
      %14 = vector.load %arg5[%c0_8, %c0_9, %c0_10, %c0_11] : memref<1x1x8x8xbf16, #tpu.memory_space<vmem>>, vector<1x1x8x8xbf16>
      %15 = vector.shape_cast %14 : vector<1x1x8x8xbf16> to vector<8x8xbf16>
      %cst = arith.constant dense<0.000000e+00> : vector<8x8xf32>
      %16 = tpu.matmul %13, %15, %cst {dimension_numbers = #tpu.dot_dimension_numbers<[1], [1], [0], [0], [0, 0, 1, 0], [], []>} : vector<8x8xbf16>, vector<8x8xbf16>, vector<8x8xf32> -> vector<8x8xf32>
      %cst_12 = arith.constant 0.353553385 : f32
      %17 = vector.broadcast %cst_12 : f32 to vector<8x8xf32>
      %18 = arith.mulf %16, %17 : vector<8x8xf32>
      %19 = tpu.iota {dimensions = array<i32: 0>} : vector<8x8xi32>
      %20 = vector.broadcast %0 : i32 to vector<8x8xi32>
      %21 = arith.addi %20, %19 : vector<8x8xi32>
      %22 = tpu.iota {dimensions = array<i32: 1>} : vector<8x8xi32>
      %23 = vector.broadcast %1 : i32 to vector<8x8xi32>
      %24 = arith.addi %23, %22 : vector<8x8xi32>
      %25 = arith.cmpi sge, %21, %24 : vector<8x8xi32>
      %cst_13 = arith.constant -1.000000e+30 : f32
      %26 = vector.broadcast %cst_13 : f32 to vector<8x8xf32>
      %27 = arith.select %25, %18, %26 : vector<8x8xi1>, vector<8x8xf32>
      %c0_14 = arith.constant 0 : index
      %c0_15 = arith.constant 0 : index
      %28 = vector.load %arg8[%c0_14, %c0_15] : memref<8x1xf32, #tpu.memory_space<vmem>>, vector<8x1xf32>
      %cst_16 = arith.constant dense<0xFF800000> : vector<8xf32>
      %29 = vector.multi_reduction <maximumf>, %27, %cst_16 [1] : vector<8x8xf32> to vector<8xf32>
      %30 = vector.shape_cast %29 : vector<8xf32> to vector<8x1xf32>
      %31 = arith.maximumf %28, %30 : vector<8x1xf32>
      %32 = arith.subf %28, %31 : vector<8x1xf32>
      %33 = math.exp %32 : vector<8x1xf32>
      %34 = vector.broadcast %31 : vector<8x1xf32> to vector<8x8xf32>
      %35 = arith.subf %27, %34 : vector<8x8xf32>
      %36 = math.exp %35 : vector<8x8xf32>
      %c0_17 = arith.constant 0 : index
      %c0_18 = arith.constant 0 : index
      %37 = vector.load %arg9[%c0_17, %c0_18] : memref<8x1xf32, #tpu.memory_space<vmem>>, vector<8x1xf32>
      %38 = arith.mulf %33, %37 : vector<8x1xf32>
      %cst_19 = arith.constant dense<0.000000e+00> : vector<8xf32>
      %39 = vector.multi_reduction <add>, %36, %cst_19 [1] : vector<8x8xf32> to vector<8xf32>
      %40 = vector.shape_cast %39 : vector<8xf32> to vector<8x1xf32>
      %41 = arith.addf %38, %40 : vector<8x1xf32>
      %c0_20 = arith.constant 0 : index
      %c0_21 = arith.constant 0 : index
      %42 = vector.load %arg9[%c0_20, %c0_21] : memref<8x1xf32, #tpu.memory_space<vmem>>, vector<8x1xf32>
      tpu.vector_store %arg9[%c0_20, %c0_21], %41 {strides = array<i32>} : memref<8x1xf32, #tpu.memory_space<vmem>>, vector<8x1xf32>,
      %c0_22 = arith.constant 0 : index
      %c0_23 = arith.constant 0 : index
      %43 = vector.load %arg10[%c0_22, %c0_23] : memref<8x8xf32, #tpu.memory_space<vmem>>, vector<8x8xf32>
      %44 = vector.broadcast %33 : vector<8x1xf32> to vector<8x8xf32>
      %45 = arith.mulf %44, %43 : vector<8x8xf32>
      %46 = arith.truncf %36 : vector<8x8xf32> to vector<8x8xbf16>
      %c0_24 = arith.constant 0 : index
      %c0_25 = arith.constant 0 : index
      %c0_26 = arith.constant 0 : index
      %c0_27 = arith.constant 0 : index
      %47 = vector.load %arg6[%c0_24, %c0_25, %c0_26, %c0_27] : memref<1x1x8x8xbf16, #tpu.memory_space<vmem>>, vector<1x1x8x8xbf16>
      %48 = vector.shape_cast %47 : vector<1x1x8x8xbf16> to vector<8x8xbf16>
      %cst_28 = arith.constant dense<0.000000e+00> : vector<8x8xf32>
      %49 = tpu.matmul %46, %48, %cst_28 {dimension_numbers = #tpu.dot_dimension_numbers<[1], [0], [0], [1], [0, 0, 1, 1], [], []>} : vector<8x8xbf16>, vector<8x8xbf16>, vector<8x8xf32> -> vector<8x8xf32>
      %50 = arith.addf %45, %49 : vector<8x8xf32>
      %c0_29 = arith.constant 0 : index
      %c0_30 = arith.constant 0 : index
      %51 = vector.load %arg10[%c0_29, %c0_30] : memref<8x8xf32, #tpu.memory_space<vmem>>, vector<8x8xf32>
      tpu.vector_store %arg10[%c0_29, %c0_30], %50 {strides = array<i32>} : memref<8x8xf32, #tpu.memory_space<vmem>>, vector<8x8xf32>,
      %c0_31 = arith.constant 0 : index
      %c0_32 = arith.constant 0 : index
      %52 = vector.load %arg8[%c0_31, %c0_32] : memref<8x1xf32, #tpu.memory_space<vmem>>, vector<8x1xf32>
      tpu.vector_store %arg8[%c0_31, %c0_32], %31 {strides = array<i32>} : memref<8x1xf32, #tpu.memory_space<vmem>>, vector<8x1xf32>,
    } else {
    }
    %c0_i32_3 = arith.constant 0 : i32
    %9 = arith.cmpi eq, %arg3, %c0_i32_3 : i32
    %10 = arith.extui %9 : i1 to i32
    %c0_i32_4 = arith.constant 0 : i32
    %11 = arith.cmpi ne, %10, %c0_i32_4 : i32
    scf.if %11 {
      %c0 = arith.constant 0 : index
      %c0_5 = arith.constant 0 : index
      %12 = vector.load %arg10[%c0, %c0_5] : memref<8x8xf32, #tpu.memory_space<vmem>>, vector<8x8xf32>
      %c0_6 = arith.constant 0 : index
      %c0_7 = arith.constant 0 : index
      %13 = vector.load %arg9[%c0_6, %c0_7] : memref<8x1xf32, #tpu.memory_space<vmem>>, vector<8x1xf32>
      %14 = tpu.reciprocal %13 {approx = true} : vector<8x1xf32> -> vector<8x1xf32>
      %15 = vector.broadcast %14 : vector<8x1xf32> to vector<8x8xf32>
      %16 = arith.mulf %12, %15 : vector<8x8xf32>
      %17 = arith.truncf %16 : vector<8x8xf32> to vector<8x8xbf16>
      %c0_8 = arith.constant 0 : index
      %c0_9 = arith.constant 0 : index
      %c0_10 = arith.constant 0 : index
      %c0_11 = arith.constant 0 : index
      %18 = vector.load %arg7[%c0_8, %c0_9, %c0_10, %c0_11] : memref<1x1x8x8xbf16, #tpu.memory_space<vmem>>, vector<1x1x8x8xbf16>
      %19 = vector.shape_cast %18 : vector<1x1x8x8xbf16> to vector<8x8xbf16>
      %20 = vector.shape_cast %17 : vector<8x8xbf16> to vector<1x1x8x8xbf16>
      tpu.vector_store %arg7[%c0_8, %c0_9, %c0_10, %c0_11], %20 {strides = array<i32>} : memref<1x1x8x8xbf16, #tpu.memory_space<vmem>>, vector<1x1x8x8xbf16>,
    } else {
    }
    return
  }
  func.func @transform_0(%arg0: i32, %arg1: i32, %arg2: i32, %arg3: i32) -> (i32, i32, i32, i32) {
    %c0_i32 = arith.constant 0 : i32
    %c0_i32_0 = arith.constant 0 : i32
    return %arg0, %arg1, %arg2, %c0_i32 : i32, i32, i32, i32
  }
  func.func @transform_1(%arg0: i32, %arg1: i32, %arg2: i32, %arg3: i32) -> (i32, i32, i32, i32) {
    %c0_i32 = arith.constant 0 : i32
    %c0_i32_0 = arith.constant 0 : i32
    return %arg0, %arg1, %arg3, %c0_i32 : i32, i32, i32, i32
  }
  func.func @transform_2(%arg0: i32, %arg1: i32, %arg2: i32, %arg3: i32) -> (i32, i32, i32, i32) {
    %c0_i32 = arith.constant 0 : i32
    %c0_i32_0 = arith.constant 0 : i32
    return %arg0, %arg1, %arg3, %c0_i32 : i32, i32, i32, i32
  }
  func.func @transform_3(%arg0: i32, %arg1: i32, %arg2: i32, %arg3: i32) -> (i32, i32, i32, i32) {
    %c0_i32 = arith.constant 0 : i32
    %c0_i32_0 = arith.constant 0 : i32
    return %arg0, %arg1, %arg2, %c0_i32 : i32, i32, i32, i32
  }
}

module attributes {stable_mosaic.version = 11 : i64} {
  func.func @_final_ln_lm_head_kernel(%arg0: i32, %arg1: i32, %arg2: i32, %arg3: memref<16x32xf32, #tpu.memory_space<vmem>>, %arg4: memref<1x32xf32, #tpu.memory_space<vmem>>, %arg5: memref<1x32xf32, #tpu.memory_space<vmem>>, %arg6: memref<32x64xbf16, #tpu.memory_space<vmem>>, %arg7: memref<1x64xf32, #tpu.memory_space<vmem>>, %arg8: memref<16x64xf32, #tpu.memory_space<vmem>>, %arg9: memref<1x16x32xbf16, #tpu.memory_space<vmem>>, %arg10: memref<16x64xf32, #tpu.memory_space<vmem>>) attributes {dimension_semantics = [#tpu.dimension_semantics<parallel>, #tpu.dimension_semantics<arbitrary>, #tpu.dimension_semantics<arbitrary>], iteration_bounds = array<i64: 1, 1, 1>, scalar_prefetch = 0 : i64, scratch_operands = 2 : i64, tpu.core_type = #tpu.core_type<tc>, window_params = [{transform_indices = @transform_0, window_bounds = array<i64: 16, 32>}, {pipeline_mode = #tpu.pipeline_mode<synchronous>, transform_indices = @transform_1, window_bounds = array<i64: 1, 32>}, {pipeline_mode = #tpu.pipeline_mode<synchronous>, transform_indices = @transform_2, window_bounds = array<i64: 1, 32>}, {transform_indices = @transform_3, window_bounds = array<i64: 32, 64>}, {transform_indices = @transform_4, window_bounds = array<i64: 1, 64>}, {transform_indices = @transform_5, window_bounds = array<i64: 16, 64>}]} {
    %c0_i32 = arith.constant 0 : i32
    %0 = arith.cmpi eq, %arg1, %c0_i32 : i32
    %c0_i32_0 = arith.constant 0 : i32
    %1 = arith.cmpi eq, %arg2, %c0_i32_0 : i32
    %2 = arith.andi %0, %1 : i1
    %3 = arith.extui %2 : i1 to i32
    %c0_i32_1 = arith.constant 0 : i32
    %4 = arith.cmpi ne, %3, %c0_i32_1 : i32
    scf.if %4 {
      %c0_13 = arith.constant 0 : index
      %c0_14 = arith.constant 0 : index
      %19 = vector.load %arg3[%c0_13, %c0_14] : memref<16x32xf32, #tpu.memory_space<vmem>>, vector<16x32xf32>
      %c0_15 = arith.constant 0 : index
      %c0_16 = arith.constant 0 : index
      %20 = vector.load %arg4[%c0_15, %c0_16] : memref<1x32xf32, #tpu.memory_space<vmem>>, vector<1x32xf32>
      %c0_17 = arith.constant 0 : index
      %c0_18 = arith.constant 0 : index
      %21 = vector.load %arg5[%c0_17, %c0_18] : memref<1x32xf32, #tpu.memory_space<vmem>>, vector<1x32xf32>
      %cst_19 = arith.constant dense<0.000000e+00> : vector<16xf32>
      %22 = vector.multi_reduction <add>, %19, %cst_19 [1] : vector<16x32xf32> to vector<16xf32>
      %23 = vector.shape_cast %22 : vector<16xf32> to vector<16x1xf32>
      %cst_20 = arith.constant 3.200000e+01 : f32
      %24 = vector.broadcast %cst_20 : f32 to vector<16x1xf32>
      %25 = arith.divf %23, %24 : vector<16x1xf32>
      %26 = vector.broadcast %25 : vector<16x1xf32> to vector<16x32xf32>
      %27 = arith.subf %19, %26 : vector<16x32xf32>
      %28 = arith.mulf %27, %27 : vector<16x32xf32>
      %cst_21 = arith.constant dense<0.000000e+00> : vector<16xf32>
      %29 = vector.multi_reduction <add>, %28, %cst_21 [1] : vector<16x32xf32> to vector<16xf32>
      %30 = vector.shape_cast %29 : vector<16xf32> to vector<16x1xf32>
      %cst_22 = arith.constant 3.200000e+01 : f32
      %31 = vector.broadcast %cst_22 : f32 to vector<16x1xf32>
      %32 = arith.divf %30, %31 : vector<16x1xf32>
      %33 = vector.broadcast %25 : vector<16x1xf32> to vector<16x32xf32>
      %34 = arith.subf %19, %33 : vector<16x32xf32>
      %cst_23 = arith.constant 9.99999974E-6 : f32
      %35 = vector.broadcast %cst_23 : f32 to vector<16x1xf32>
      %36 = arith.addf %32, %35 : vector<16x1xf32>
      %37 = math.rsqrt %36 : vector<16x1xf32>
      %38 = vector.broadcast %37 : vector<16x1xf32> to vector<16x32xf32>
      %39 = arith.mulf %34, %38 : vector<16x32xf32>
      %40 = vector.broadcast %20 : vector<1x32xf32> to vector<16x32xf32>
      %41 = arith.mulf %39, %40 : vector<16x32xf32>
      %42 = vector.broadcast %21 : vector<1x32xf32> to vector<16x32xf32>
      %43 = arith.addf %41, %42 : vector<16x32xf32>
      %44 = arith.truncf %43 : vector<16x32xf32> to vector<16x32xbf16>
      %c0_24 = arith.constant 0 : index
      %c0_25 = arith.constant 0 : index
      %c0_26 = arith.constant 0 : index
      %45 = vector.load %arg9[%c0_24, %c0_25, %c0_26] : memref<1x16x32xbf16, #tpu.memory_space<vmem>>, vector<1x16x32xbf16>
      %46 = vector.shape_cast %45 : vector<1x16x32xbf16> to vector<16x32xbf16>
      %47 = vector.shape_cast %44 : vector<16x32xbf16> to vector<1x16x32xbf16>
      tpu.vector_store %arg9[%c0_24, %c0_25, %c0_26], %47 {strides = array<i32>} : memref<1x16x32xbf16, #tpu.memory_space<vmem>>, vector<1x16x32xbf16>,
    } else {
    }
    %c0_i32_2 = arith.constant 0 : i32
    %5 = arith.cmpi eq, %arg2, %c0_i32_2 : i32
    %6 = arith.extui %5 : i1 to i32
    %c0_i32_3 = arith.constant 0 : i32
    %7 = arith.cmpi ne, %6, %c0_i32_3 : i32
    scf.if %7 {
      %cst_13 = arith.constant 0.000000e+00 : f32
      %19 = vector.broadcast %cst_13 : f32 to vector<16x64xf32>
      %c0_14 = arith.constant 0 : index
      %c0_15 = arith.constant 0 : index
      %20 = vector.load %arg10[%c0_14, %c0_15] : memref<16x64xf32, #tpu.memory_space<vmem>>, vector<16x64xf32>
      tpu.vector_store %arg10[%c0_14, %c0_15], %19 {strides = array<i32>} : memref<16x64xf32, #tpu.memory_space<vmem>>, vector<16x64xf32>,
    } else {
    }
    %c0 = arith.constant 0 : index
    %c0_4 = arith.constant 0 : index
    %8 = vector.load %arg10[%c0, %c0_4] : memref<16x64xf32, #tpu.memory_space<vmem>>, vector<16x64xf32>
    %9 = arith.index_cast %arg2 : i32 to index
    %c0_5 = arith.constant 0 : index
    %c0_6 = arith.constant 0 : index
    %10 = vector.load %arg9[%9, %c0_5, %c0_6] : memref<1x16x32xbf16, #tpu.memory_space<vmem>>, vector<1x16x32xbf16>
    %11 = vector.shape_cast %10 : vector<1x16x32xbf16> to vector<16x32xbf16>
    %c0_7 = arith.constant 0 : index
    %c0_8 = arith.constant 0 : index
    %12 = vector.load %arg6[%c0_7, %c0_8] : memref<32x64xbf16, #tpu.memory_space<vmem>>, vector<32x64xbf16>
    %cst = arith.constant dense<0.000000e+00> : vector<16x64xf32>
    %13 = tpu.matmul %11, %12, %cst {dimension_numbers = #tpu.dot_dimension_numbers<[1], [0], [0], [1], [0, 0, 1, 1], [], []>} : vector<16x32xbf16>, vector<32x64xbf16>, vector<16x64xf32> -> vector<16x64xf32>
    %14 = arith.addf %8, %13 : vector<16x64xf32>
    %c0_9 = arith.constant 0 : index
    %c0_10 = arith.constant 0 : index
    %15 = vector.load %arg10[%c0_9, %c0_10] : memref<16x64xf32, #tpu.memory_space<vmem>>, vector<16x64xf32>
    tpu.vector_store %arg10[%c0_9, %c0_10], %14 {strides = array<i32>} : memref<16x64xf32, #tpu.memory_space<vmem>>, vector<16x64xf32>,
    %c0_i32_11 = arith.constant 0 : i32
    %16 = arith.cmpi eq, %arg2, %c0_i32_11 : i32
    %17 = arith.extui %16 : i1 to i32
    %c0_i32_12 = arith.constant 0 : i32
    %18 = arith.cmpi ne, %17, %c0_i32_12 : i32
    scf.if %18 {
      %c0_13 = arith.constant 0 : index
      %c0_14 = arith.constant 0 : index
      %19 = vector.load %arg10[%c0_13, %c0_14] : memref<16x64xf32, #tpu.memory_space<vmem>>, vector<16x64xf32>
      %c0_15 = arith.constant 0 : index
      %c0_16 = arith.constant 0 : index
      %20 = vector.load %arg7[%c0_15, %c0_16] : memref<1x64xf32, #tpu.memory_space<vmem>>, vector<1x64xf32>
      %21 = vector.broadcast %20 : vector<1x64xf32> to vector<16x64xf32>
      %22 = arith.addf %19, %21 : vector<16x64xf32>
      %c0_17 = arith.constant 0 : index
      %c0_18 = arith.constant 0 : index
      %23 = vector.load %arg8[%c0_17, %c0_18] : memref<16x64xf32, #tpu.memory_space<vmem>>, vector<16x64xf32>
      tpu.vector_store %arg8[%c0_17, %c0_18], %22 {strides = array<i32>} : memref<16x64xf32, #tpu.memory_space<vmem>>, vector<16x64xf32>,
    } else {
    }
    return
  }
  func.func @transform_0(%arg0: i32, %arg1: i32, %arg2: i32) -> (i32, i32) {
    %c0_i32 = arith.constant 0 : i32
    %c0_i32_0 = arith.constant 0 : i32
    return %arg0, %c0_i32 : i32, i32
  }
  func.func @transform_1(%arg0: i32, %arg1: i32, %arg2: i32) -> (i32, i32) {
    %c0_i32 = arith.constant 0 : i32
    %c0_i32_0 = arith.constant 0 : i32
    %c0_i32_1 = arith.constant 0 : i32
    return %c0_i32, %c0_i32_0 : i32, i32
  }
  func.func @transform_2(%arg0: i32, %arg1: i32, %arg2: i32) -> (i32, i32) {
    %c0_i32 = arith.constant 0 : i32
    %c0_i32_0 = arith.constant 0 : i32
    %c0_i32_1 = arith.constant 0 : i32
    return %c0_i32, %c0_i32_0 : i32, i32
  }
  func.func @transform_3(%arg0: i32, %arg1: i32, %arg2: i32) -> (i32, i32) {
    %c0_i32 = arith.constant 0 : i32
    return %arg2, %arg1 : i32, i32
  }
  func.func @transform_4(%arg0: i32, %arg1: i32, %arg2: i32) -> (i32, i32) {
    %c0_i32 = arith.constant 0 : i32
    %c0_i32_0 = arith.constant 0 : i32
    return %c0_i32, %arg1 : i32, i32
  }
  func.func @transform_5(%arg0: i32, %arg1: i32, %arg2: i32) -> (i32, i32) {
    %c0_i32 = arith.constant 0 : i32
    return %arg0, %arg1 : i32, i32
  }
}

module attributes {stable_mosaic.version = 11 : i64} {
  func.func @_attn_out_ffn_kernel(%arg0: i32, %arg1: i32, %arg2: memref<16x32xf32, #tpu.memory_space<vmem>>, %arg3: memref<16x32xbf16, #tpu.memory_space<vmem>>, %arg4: memref<32x32xbf16, #tpu.memory_space<vmem>>, %arg5: memref<1x32xf32, #tpu.memory_space<vmem>>, %arg6: memref<1x32xf32, #tpu.memory_space<vmem>>, %arg7: memref<1x32xf32, #tpu.memory_space<vmem>>, %arg8: memref<32x64xbf16, #tpu.memory_space<vmem>>, %arg9: memref<1x64xf32, #tpu.memory_space<vmem>>, %arg10: memref<64x32xbf16, #tpu.memory_space<vmem>>, %arg11: memref<1x32xf32, #tpu.memory_space<vmem>>, %arg12: memref<16x32xf32, #tpu.memory_space<vmem>>, %arg13: memref<16x32xf32, #tpu.memory_space<vmem>>, %arg14: memref<16x32xbf16, #tpu.memory_space<vmem>>, %arg15: memref<16x32xf32, #tpu.memory_space<vmem>>) attributes {dimension_semantics = [#tpu.dimension_semantics<parallel>, #tpu.dimension_semantics<arbitrary>], iteration_bounds = array<i64: 1, 1>, scalar_prefetch = 0 : i64, scratch_operands = 3 : i64, tpu.core_type = #tpu.core_type<tc>, window_params = [{transform_indices = @transform_0, window_bounds = array<i64: 16, 32>}, {transform_indices = @transform_1, window_bounds = array<i64: 16, 32>}, {pipeline_mode = #tpu.pipeline_mode<synchronous>, transform_indices = @transform_2, window_bounds = array<i64: 32, 32>}, {pipeline_mode = #tpu.pipeline_mode<synchronous>, transform_indices = @transform_3, window_bounds = array<i64: 1, 32>}, {pipeline_mode = #tpu.pipeline_mode<synchronous>, transform_indices = @transform_4, window_bounds = array<i64: 1, 32>}, {pipeline_mode = #tpu.pipeline_mode<synchronous>, transform_indices = @transform_5, window_bounds = array<i64: 1, 32>}, {transform_indices = @transform_6, window_bounds = array<i64: 32, 64>}, {transform_indices = @transform_7, window_bounds = array<i64: 1, 64>}, {transform_indices = @transform_8, window_bounds = array<i64: 64, 32>}, {pipeline_mode = #tpu.pipeline_mode<synchronous>, transform_indices = @transform_9, window_bounds = array<i64: 1, 32>}, {transform_indices = @transform_10, window_bounds = array<i64: 16, 32>}]} {
    %c0_i32 = arith.constant 0 : i32
    %0 = arith.cmpi eq, %arg1, %c0_i32 : i32
    %1 = arith.extui %0 : i1 to i32
    %c0_i32_0 = arith.constant 0 : i32
    %2 = arith.cmpi ne, %1, %c0_i32_0 : i32
    scf.if %2 {
      %c0_19 = arith.constant 0 : index
      %c0_20 = arith.constant 0 : index
      %31 = vector.load %arg2[%c0_19, %c0_20] : memref<16x32xf32, #tpu.memory_space<vmem>>, vector<16x32xf32>
      %c0_21 = arith.constant 0 : index
      %c0_22 = arith.constant 0 : index
      %32 = vector.load %arg3[%c0_21, %c0_22] : memref<16x32xbf16, #tpu.memory_space<vmem>>, vector<16x32xbf16>
      %c0_23 = arith.constant 0 : index
      %c0_24 = arith.constant 0 : index
      %33 = vector.load %arg4[%c0_23, %c0_24] : memref<32x32xbf16, #tpu.memory_space<vmem>>, vector<32x32xbf16>
      %cst_25 = arith.constant dense<0.000000e+00> : vector<16x32xf32>
      %34 = tpu.matmul %32, %33, %cst_25 {dimension_numbers = #tpu.dot_dimension_numbers<[1], [0], [0], [1], [0, 0, 1, 1], [], []>} : vector<16x32xbf16>, vector<32x32xbf16>, vector<16x32xf32> -> vector<16x32xf32>
      %c0_26 = arith.constant 0 : index
      %c0_27 = arith.constant 0 : index
      %35 = vector.load %arg5[%c0_26, %c0_27] : memref<1x32xf32, #tpu.memory_space<vmem>>, vector<1x32xf32>
      %36 = vector.broadcast %35 : vector<1x32xf32> to vector<16x32xf32>
      %37 = arith.addf %34, %36 : vector<16x32xf32>
      %38 = arith.addf %31, %37 : vector<16x32xf32>
      %c0_28 = arith.constant 0 : index
      %c0_29 = arith.constant 0 : index
      %39 = vector.load %arg13[%c0_28, %c0_29] : memref<16x32xf32, #tpu.memory_space<vmem>>, vector<16x32xf32>
      tpu.vector_store %arg13[%c0_28, %c0_29], %38 {strides = array<i32>} : memref<16x32xf32, #tpu.memory_space<vmem>>, vector<16x32xf32>,
      %c0_30 = arith.constant 0 : index
      %c0_31 = arith.constant 0 : index
      %40 = vector.load %arg6[%c0_30, %c0_31] : memref<1x32xf32, #tpu.memory_space<vmem>>, vector<1x32xf32>
      %c0_32 = arith.constant 0 : index
      %c0_33 = arith.constant 0 : index
      %41 = vector.load %arg7[%c0_32, %c0_33] : memref<1x32xf32, #tpu.memory_space<vmem>>, vector<1x32xf32>
      %cst_34 = arith.constant dense<0.000000e+00> : vector<16xf32>
      %42 = vector.multi_reduction <add>, %38, %cst_34 [1] : vector<16x32xf32> to vector<16xf32>
      %43 = vector.shape_cast %42 : vector<16xf32> to vector<16x1xf32>
      %cst_35 = arith.constant 3.200000e+01 : f32
      %44 = vector.broadcast %cst_35 : f32 to vector<16x1xf32>
      %45 = arith.divf %43, %44 : vector<16x1xf32>
      %46 = vector.broadcast %45 : vector<16x1xf32> to vector<16x32xf32>
      %47 = arith.subf %38, %46 : vector<16x32xf32>
      %48 = arith.mulf %47, %47 : vector<16x32xf32>
      %cst_36 = arith.constant dense<0.000000e+00> : vector<16xf32>
      %49 = vector.multi_reduction <add>, %48, %cst_36 [1] : vector<16x32xf32> to vector<16xf32>
      %50 = vector.shape_cast %49 : vector<16xf32> to vector<16x1xf32>
      %cst_37 = arith.constant 3.200000e+01 : f32
      %51 = vector.broadcast %cst_37 : f32 to vector<16x1xf32>
      %52 = arith.divf %50, %51 : vector<16x1xf32>
      %53 = vector.broadcast %45 : vector<16x1xf32> to vector<16x32xf32>
      %54 = arith.subf %38, %53 : vector<16x32xf32>
      %cst_38 = arith.constant 9.99999974E-6 : f32
      %55 = vector.broadcast %cst_38 : f32 to vector<16x1xf32>
      %56 = arith.addf %52, %55 : vector<16x1xf32>
      %57 = math.rsqrt %56 : vector<16x1xf32>
      %58 = vector.broadcast %57 : vector<16x1xf32> to vector<16x32xf32>
      %59 = arith.mulf %54, %58 : vector<16x32xf32>
      %60 = vector.broadcast %40 : vector<1x32xf32> to vector<16x32xf32>
      %61 = arith.mulf %59, %60 : vector<16x32xf32>
      %62 = vector.broadcast %41 : vector<1x32xf32> to vector<16x32xf32>
      %63 = arith.addf %61, %62 : vector<16x32xf32>
      %64 = arith.truncf %63 : vector<16x32xf32> to vector<16x32xbf16>
      %c0_39 = arith.constant 0 : index
      %c0_40 = arith.constant 0 : index
      %65 = vector.load %arg14[%c0_39, %c0_40] : memref<16x32xbf16, #tpu.memory_space<vmem>>, vector<16x32xbf16>
      tpu.vector_store %arg14[%c0_39, %c0_40], %64 {strides = array<i32>} : memref<16x32xbf16, #tpu.memory_space<vmem>>, vector<16x32xbf16>,
      %cst_41 = arith.constant 0.000000e+00 : f32
      %66 = vector.broadcast %cst_41 : f32 to vector<16x32xf32>
      %c0_42 = arith.constant 0 : index
      %c0_43 = arith.constant 0 : index
      %67 = vector.load %arg15[%c0_42, %c0_43] : memref<16x32xf32, #tpu.memory_space<vmem>>, vector<16x32xf32>
      tpu.vector_store %arg15[%c0_42, %c0_43], %66 {strides = array<i32>} : memref<16x32xf32, #tpu.memory_space<vmem>>, vector<16x32xf32>,
    } else {
    }
    %c0 = arith.constant 0 : index
    %c0_1 = arith.constant 0 : index
    %3 = vector.load %arg14[%c0, %c0_1] : memref<16x32xbf16, #tpu.memory_space<vmem>>, vector<16x32xbf16>
    %c0_2 = arith.constant 0 : index
    %c0_3 = arith.constant 0 : index
    %4 = vector.load %arg8[%c0_2, %c0_3] : memref<32x64xbf16, #tpu.memory_space<vmem>>, vector<32x64xbf16>
    %cst = arith.constant dense<0.000000e+00> : vector<16x64xf32>
    %5 = tpu.matmul %3, %4, %cst {dimension_numbers = #tpu.dot_dimension_numbers<[1], [0], [0], [1], [0, 0, 1, 1], [], []>} : vector<16x32xbf16>, vector<32x64xbf16>, vector<16x64xf32> -> vector<16x64xf32>
    %c0_4 = arith.constant 0 : index
    %c0_5 = arith.constant 0 : index
    %6 = vector.load %arg9[%c0_4, %c0_5] : memref<1x64xf32, #tpu.memory_space<vmem>>, vector<1x64xf32>
    %7 = vector.broadcast %6 : vector<1x64xf32> to vector<16x64xf32>
    %8 = arith.addf %5, %7 : vector<16x64xf32>
    %cst_6 = arith.constant 5.000000e-01 : f32
    %9 = vector.broadcast %cst_6 : f32 to vector<16x64xf32>
    %10 = arith.mulf %9, %8 : vector<16x64xf32>
    %cst_7 = arith.constant 4.471500e-02 : f32
    %11 = vector.broadcast %cst_7 : f32 to vector<16x64xf32>
    %12 = arith.mulf %11, %8 : vector<16x64xf32>
    %13 = arith.mulf %12, %8 : vector<16x64xf32>
    %14 = arith.mulf %13, %8 : vector<16x64xf32>
    %15 = arith.addf %8, %14 : vector<16x64xf32>
    %cst_8 = arith.constant 0.797884583 : f32
    %16 = vector.broadcast %cst_8 : f32 to vector<16x64xf32>
    %17 = arith.mulf %16, %15 : vector<16x64xf32>
    %18 = math.tanh %17 : vector<16x64xf32>
    %cst_9 = arith.constant 1.000000e+00 : f32
    %19 = vector.broadcast %cst_9 : f32 to vector<16x64xf32>
    %20 = arith.addf %19, %18 : vector<16x64xf32>
    %21 = arith.mulf %10, %20 : vector<16x64xf32>
    %c0_10 = arith.constant 0 : index
    %c0_11 = arith.constant 0 : index
    %22 = vector.load %arg15[%c0_10, %c0_11] : memref<16x32xf32, #tpu.memory_space<vmem>>, vector<16x32xf32>
    %23 = arith.truncf %21 : vector<16x64xf32> to vector<16x64xbf16>
    %c0_12 = arith.constant 0 : index
    %c0_13 = arith.constant 0 : index
    %24 = vector.load %arg10[%c0_12, %c0_13] : memref<64x32xbf16, #tpu.memory_space<vmem>>, vector<64x32xbf16>
    %cst_14 = arith.constant dense<0.000000e+00> : vector<16x32xf32>
    %25 = tpu.matmul %23, %24, %cst_14 {dimension_numbers = #tpu.dot_dimension_numbers<[1], [0], [0], [1], [0, 0, 1, 1], [], []>} : vector<16x64xbf16>, vector<64x32xbf16>, vector<16x32xf32> -> vector<16x32xf32>
    %26 = arith.addf %22, %25 : vector<16x32xf32>
    %c0_15 = arith.constant 0 : index
    %c0_16 = arith.constant 0 : index
    %27 = vector.load %arg15[%c0_15, %c0_16] : memref<16x32xf32, #tpu.memory_space<vmem>>, vector<16x32xf32>
    tpu.vector_store %arg15[%c0_15, %c0_16], %26 {strides = array<i32>} : memref<16x32xf32, #tpu.memory_space<vmem>>, vector<16x32xf32>,
    %c0_i32_17 = arith.constant 0 : i32
    %28 = arith.cmpi eq, %arg1, %c0_i32_17 : i32
    %29 = arith.extui %28 : i1 to i32
    %c0_i32_18 = arith.constant 0 : i32
    %30 = arith.cmpi ne, %29, %c0_i32_18 : i32
    scf.if %30 {
      %c0_19 = arith.constant 0 : index
      %c0_20 = arith.constant 0 : index
      %31 = vector.load %arg13[%c0_19, %c0_20] : memref<16x32xf32, #tpu.memory_space<vmem>>, vector<16x32xf32>
      %c0_21 = arith.constant 0 : index
      %c0_22 = arith.constant 0 : index
      %32 = vector.load %arg15[%c0_21, %c0_22] : memref<16x32xf32, #tpu.memory_space<vmem>>, vector<16x32xf32>
      %33 = arith.addf %31, %32 : vector<16x32xf32>
      %c0_23 = arith.constant 0 : index
      %c0_24 = arith.constant 0 : index
      %34 = vector.load %arg11[%c0_23, %c0_24] : memref<1x32xf32, #tpu.memory_space<vmem>>, vector<1x32xf32>
      %35 = vector.broadcast %34 : vector<1x32xf32> to vector<16x32xf32>
      %36 = arith.addf %33, %35 : vector<16x32xf32>
      %c0_25 = arith.constant 0 : index
      %c0_26 = arith.constant 0 : index
      %37 = vector.load %arg12[%c0_25, %c0_26] : memref<16x32xf32, #tpu.memory_space<vmem>>, vector<16x32xf32>
      tpu.vector_store %arg12[%c0_25, %c0_26], %36 {strides = array<i32>} : memref<16x32xf32, #tpu.memory_space<vmem>>, vector<16x32xf32>,
    } else {
    }
    return
  }
  func.func @transform_0(%arg0: i32, %arg1: i32) -> (i32, i32) {
    %c0_i32 = arith.constant 0 : i32
    %c0_i32_0 = arith.constant 0 : i32
    return %arg0, %c0_i32 : i32, i32
  }
  func.func @transform_1(%arg0: i32, %arg1: i32) -> (i32, i32) {
    %c0_i32 = arith.constant 0 : i32
    %c0_i32_0 = arith.constant 0 : i32
    return %arg0, %c0_i32 : i32, i32
  }
  func.func @transform_2(%arg0: i32, %arg1: i32) -> (i32, i32) {
    %c0_i32 = arith.constant 0 : i32
    %c0_i32_0 = arith.constant 0 : i32
    %c0_i32_1 = arith.constant 0 : i32
    return %c0_i32, %c0_i32_0 : i32, i32
  }
  func.func @transform_3(%arg0: i32, %arg1: i32) -> (i32, i32) {
    %c0_i32 = arith.constant 0 : i32
    %c0_i32_0 = arith.constant 0 : i32
    %c0_i32_1 = arith.constant 0 : i32
    return %c0_i32, %c0_i32_0 : i32, i32
  }
  func.func @transform_4(%arg0: i32, %arg1: i32) -> (i32, i32) {
    %c0_i32 = arith.constant 0 : i32
    %c0_i32_0 = arith.constant 0 : i32
    %c0_i32_1 = arith.constant 0 : i32
    return %c0_i32, %c0_i32_0 : i32, i32
  }
  func.func @transform_5(%arg0: i32, %arg1: i32) -> (i32, i32) {
    %c0_i32 = arith.constant 0 : i32
    %c0_i32_0 = arith.constant 0 : i32
    %c0_i32_1 = arith.constant 0 : i32
    return %c0_i32, %c0_i32_0 : i32, i32
  }
  func.func @transform_6(%arg0: i32, %arg1: i32) -> (i32, i32) {
    %c0_i32 = arith.constant 0 : i32
    %c0_i32_0 = arith.constant 0 : i32
    return %c0_i32, %arg1 : i32, i32
  }
  func.func @transform_7(%arg0: i32, %arg1: i32) -> (i32, i32) {
    %c0_i32 = arith.constant 0 : i32
    %c0_i32_0 = arith.constant 0 : i32
    return %c0_i32, %arg1 : i32, i32
  }
  func.func @transform_8(%arg0: i32, %arg1: i32) -> (i32, i32) {
    %c0_i32 = arith.constant 0 : i32
    %c0_i32_0 = arith.constant 0 : i32
    return %arg1, %c0_i32 : i32, i32
  }
  func.func @transform_9(%arg0: i32, %arg1: i32) -> (i32, i32) {
    %c0_i32 = arith.constant 0 : i32
    %c0_i32_0 = arith.constant 0 : i32
    %c0_i32_1 = arith.constant 0 : i32
    return %c0_i32, %c0_i32_0 : i32, i32
  }
  func.func @transform_10(%arg0: i32, %arg1: i32) -> (i32, i32) {
    %c0_i32 = arith.constant 0 : i32
    %c0_i32_0 = arith.constant 0 : i32
    return %arg0, %c0_i32 : i32, i32
  }
}

</mosaic_0001>

<llo_original>
// kernel: tpu_custom_call.1
$region0: #{tpu_custom_call.1}
  #allocation0 [shape = 'u32[]', space=smem, size = 0x4, offset = 0x4, fixed_abs, tag = 'smem constant byte address 0x4 - core index']
  #allocation1 [shape = 'u32[144,128]{1,0:T(1,128)}', space=vmem, size = 0x12000, scoped, tag = 'internal scratch']
  %s0 = inlined_call_operand.hbm [shape: f32[8,128], index: 0, kind: input, shape index: {}]
  %s1 = inlined_call_operand.hbm [shape: f32[8,128], index: 1, kind: output, shape index: {}]
  %s2 = sld [smem:[#allocation0]]
  $region41: #{tpu_custom_call.1} parent=0
    _
  %s4 = ssub.s32 1, %s2
  %s5 = scalar_select 0, %s4, %s2
  $region1: #{tpu_custom_call.1} parent=0
    #allocation2 [shape = 'u8[4096]{0}', space=vmem, size = 0x1000, scoped, tag = 'input window, operand 0, single buffered']
    #allocation3 [shape = 's32[2]{0}', space=sflag, size = 0x8, scoped, tag = 'scoped memory for tpu_custom_call.1']
    #allocation4 [shape = 's32[2]{0}', space=sflag, size = 0x8, scoped, tag = 'scoped memory for tpu_custom_call.1']
    #allocation5 [shape = 'u8[4096]{0}', space=vmem, size = 0x1000, scoped, tag = 'output window, operand 0, single buffered']
    %6 = vsyncpa [#allocation3], 0
    %7 = vsyncpa [#allocation4], 0
    loop: start=0, step=1, limit=4
    $region2: #{tpu_custom_call.1} parent=1 // loop_pre_header
      _
    $region3: #{tpu_custom_call.1} parent=1 // loop_header
      %s9 = sphi 0, %s13
      %p10 = scmp.ge.s32.totalorder %s9, 4
      %s17 = sphi 0, %s17
      %s19 = sphi 0, %s17
      %s20 = sphi 0, %s19
      %s34 = sphi 0, %s20
      %s38 = sphi 0, %s38
      %s40 = sphi 0, %s38
      %s41 = sphi 0, %s40
      %s55 = sphi 0, %s41
    $region4: #{tpu_custom_call.1} parent=1 // loop_header_branch
      %12 = sbr.rel (%p10) target = $region8
    $region5: #{tpu_custom_call.1} parent=1 // loop_body
      %s14 = ssub.s32 %s9, 1
      %s15 = ssub.s32 %s9, 2
      %s16 = sadd.s32 %s9, 1
      %s18 = sadd.s32 %s17, 1
      %p21 = scmp.eq.s32.totalorder %s9, 1
      %p22 = scmp.ne.s32.totalorder %s17, %s19
      %p23 = scmp.eq.s32.totalorder %s9, 0
      %p24 = por %p22, %p23
      %p25 = scmp.ne.s32.totalorder %s17, %s19
      %p26 = scmp.eq.s32.totalorder %s14, 1
      %p27 = por %p25, %p26
      %p28 = scmp.ne.s32.totalorder %s19, %s20
      %p29 = scmp.eq.s32.totalorder %s14, 0
      %p30 = por %p28, %p29
      %p31 = scmp.ne.s32.totalorder %s19, %s20
      %p32 = scmp.eq.s32.totalorder %s15, 1
      %p33 = por %p31, %p32
      %p35 = scmp.ne.s32.totalorder %s20, %s34
      %p36 = scmp.eq.s32.totalorder %s15, 0
      %p37 = por %p35, %p36
      %s39 = sadd.s32 %s38, 1
      %p42 = scmp.eq.s32.totalorder %s9, 1
      %p43 = scmp.ne.s32.totalorder %s38, %s40
      %p44 = scmp.eq.s32.totalorder %s9, 0
      %p45 = por %p43, %p44
      %p46 = scmp.ne.s32.totalorder %s38, %s40
      %p47 = scmp.eq.s32.totalorder %s14, 1
      %p48 = por %p46, %p47
      %p49 = scmp.ne.s32.totalorder %s40, %s41
      %p50 = scmp.eq.s32.totalorder %s14, 0
      %p51 = por %p49, %p50
      %p52 = scmp.ne.s32.totalorder %s40, %s41
      %p53 = scmp.eq.s32.totalorder %s15, 1
      %p54 = por %p52, %p53
      %p56 = scmp.ne.s32.totalorder %s41, %s55
      %p57 = scmp.eq.s32.totalorder %s15, 0
      %p58 = por %p56, %p57
      %p59 = scmp.le.s32.totalorder 1, %s9
      %p60 = scmp.lt.s32.totalorder %s9, 3
      %p61 = pnand %p59, %p60
      %p62 = pneg %p61
      // Predicated region
      $region9: #{tpu_custom_call.1} parent=5 // pred_check
        _
      $region10: #{tpu_custom_call.1} parent=5 // pred_check_branch
        %64 = sbr.rel (%p61) target = $region12
      $region11: #{tpu_custom_call.1} parent=5 // pred_region
        %s65 = ssub.s32 %s9, 1
        // Predicated region
        $region13: #{tpu_custom_call.1} parent=11 // pred_check
          %p66 = pneg %p30
        $region14: #{tpu_custom_call.1} parent=11 // pred_check_branch
          %68 = sbr.rel (%p66) target = $region16
        $region15: #{tpu_custom_call.1} parent=11 // pred_region
          %s70 = ssub.s32 128, 128
          %71 = vsyncadd [#allocation3], %s70
          %s73 = sshll.u32 [#allocation2], 4
          %s74 = int_to_ptr.vmem [resolvable:$true] %s73
          %76 = dma.hbm_to_vmem [thread:$0]  %s0, 128, %s74, [#allocation3]
        $region16: #{tpu_custom_call.1} parent=11 // pred_fallthru
          _
      $region12: #{tpu_custom_call.1} parent=5 // pred_fallthru
        _
      %p77 = scmp.lt.s32.totalorder %s9, 2
      // Predicated region
      $region17: #{tpu_custom_call.1} parent=5 // pred_check
        %p78 = pneg %p77
      $region18: #{tpu_custom_call.1} parent=5 // pred_check_branch
        %80 = sbr.rel (%p78) target = $region20
      $region19: #{tpu_custom_call.1} parent=5 // pred_region
        _
      $region20: #{tpu_custom_call.1} parent=5 // pred_fallthru
        _
      %p81 = scmp.le.s32.totalorder 1, %s9
      %p82 = scmp.lt.s32.totalorder %s9, 3
      %p83 = pnand %p81, %p82
      %p84 = pneg %p83
      // Predicated region
      $region21: #{tpu_custom_call.1} parent=5 // pred_check
        _
      $region22: #{tpu_custom_call.1} parent=5 // pred_check_branch
        %86 = sbr.rel (%p83) target = $region24
      $region23: #{tpu_custom_call.1} parent=5 // pred_region
        %s87 = ssub.s32 %s9, 1
        // Predicated region
        $region25: #{tpu_custom_call.1} parent=23 // pred_check
          %p88 = pneg %p30
        $region26: #{tpu_custom_call.1} parent=23 // pred_check_branch
          %90 = sbr.rel (%p88) target = $region28
        $region27: #{tpu_custom_call.1} parent=23 // pred_region
          %91 = dma.done [#allocation3], 128
        $region28: #{tpu_custom_call.1} parent=23 // pred_fallthru
          _
        %p92 = pneg %p30
        %p93 = pneg %p27
        %p94 = pneg %p51
        %p95 = pneg %p48
        %v96 = vld [vmem:[#allocation2] sm:$0xff]
        %97 = vst [vmem:[#allocation5] sm:$0xff] %v96
        // Predicated region
        $region29: #{tpu_custom_call.1} parent=23 // pred_check
          %p98 = pneg %p48
        $region30: #{tpu_custom_call.1} parent=23 // pred_check_branch
          %100 = sbr.rel (%p98) target = $region32
        $region31: #{tpu_custom_call.1} parent=23 // pred_region
          %s102 = ssub.s32 128, 128
          %103 = vsyncadd [#allocation4], %s102
          %s105 = sshll.u32 [#allocation5], 4
          %s106 = int_to_ptr.vmem [resolvable:$true] %s105
          %108 = dma.vmem_to_hbm [thread:$0]  %s106, 128, %s1, [#allocation4]
        $region32: #{tpu_custom_call.1} parent=23 // pred_fallthru
          _
        // Predicated region
        $region33: #{tpu_custom_call.1} parent=23 // pred_check
          %p109 = pneg %p48
        $region34: #{tpu_custom_call.1} parent=23 // pred_check_branch
          %111 = sbr.rel (%p109) target = $region36
        $region35: #{tpu_custom_call.1} parent=23 // pred_region
          %112 = dma.done [#allocation4], 128
        $region36: #{tpu_custom_call.1} parent=23 // pred_fallthru
          _
      $region24: #{tpu_custom_call.1} parent=5 // pred_fallthru
        _
      %p113 = scmp.le.s32.totalorder 2, %s9
      // Predicated region
      $region37: #{tpu_custom_call.1} parent=5 // pred_check
        %p114 = pneg %p113
      $region38: #{tpu_custom_call.1} parent=5 // pred_check_branch
        %116 = sbr.rel (%p114) target = $region40
      $region39: #{tpu_custom_call.1} parent=5 // pred_region
        %s117 = ssub.s32 %s9, 2
      $region40: #{tpu_custom_call.1} parent=5 // pred_fallthru
        _
    $region6: #{tpu_custom_call.1} parent=1 // loop_footer
      %s13 = sadd.s32 1, %s9
    $region7: #{tpu_custom_call.1} parent=1 // loop_footer_branch
      %8 = sbr.rel target = $region3
    $region8: #{tpu_custom_call.1} parent=1 // loop_exit
      _
    %118 = vsyncpa [#allocation3], 1
    %s119 = scalar_lea.sflag [#allocation3], 1
    %120 = vsyncpa %s119, 1
    %121 = vsyncpa [#allocation4], 1
    %s122 = scalar_lea.sflag [#allocation4], 1
    %123 = vsyncpa %s122, 1

// kernel: gpt_forward.7
$region0: #{gpt_forward.7}
  #allocation0 [shape = 'u32[]', space=smem, size = 0x4, offset = 0x4, fixed_abs, tag = 'smem constant byte address 0x4 - core index']
  #allocation1 [shape = 'u32[144,128]{1,0:T(1,128)}', space=vmem, size = 0x12000, scoped, tag = 'internal scratch']
  %s0 = inlined_call_operand.vmem [shape: f32[16,32], index: 0, kind: input, shape index: {}]
  %s1 = inlined_call_operand.vmem [shape: f32[1,32], index: 1, kind: input, shape index: {}]
  %s2 = inlined_call_operand.vmem [shape: f32[1,32], index: 2, kind: input, shape index: {}]
  %s3 = inlined_call_operand.vmem [shape: bf16[32,96], index: 3, kind: input, shape index: {}]
  %s4 = inlined_call_operand.vmem [shape: f32[1,96], index: 4, kind: input, shape index: {}]
  %s5 = inlined_call_operand.vmem [shape: bf16[16,96], index: 5, kind: output, shape index: {}]
  %s6 = sld [smem:[#allocation0]]
  $region30: #{gpt_forward.7} parent=0
    _
  %s8 = ssub.s32 1, %s6
  %s9 = scalar_select 0, %s8, %s6
  // Predicated region
  $region2: #{gpt_forward.7} parent=0 // pred_check
    _
  $region3: #{gpt_forward.7} parent=0 // pred_check_branch
    %11 = sbr.rel (0) target = $region5
  $region4: #{gpt_forward.7} parent=0 // pred_region
    _
  $region5: #{gpt_forward.7} parent=0 // pred_fallthru
    _
  // Predicated region
  $region6: #{gpt_forward.7} parent=0 // pred_check
    _
  $region7: #{gpt_forward.7} parent=0 // pred_check_branch
    %13 = sbr.rel (0) target = $region9
  $region8: #{gpt_forward.7} parent=0 // pred_region
    _
  $region9: #{gpt_forward.7} parent=0 // pred_fallthru
    _
  // Predicated region
  $region10: #{gpt_forward.7} parent=0 // pred_check
    _
  $region11: #{gpt_forward.7} parent=0 // pred_check_branch
    %15 = sbr.rel (0) target = $region13
  $region12: #{gpt_forward.7} parent=0 // pred_region
    _
  $region13: #{gpt_forward.7} parent=0 // pred_fallthru
    _
  // Predicated region
  $region14: #{gpt_forward.7} parent=0 // pred_check
    _
  $region15: #{gpt_forward.7} parent=0 // pred_check_branch
    %17 = sbr.rel (0) target = $region17
  $region16: #{gpt_forward.7} parent=0 // pred_region
    _
  $region17: #{gpt_forward.7} parent=0 // pred_fallthru
    _
  // Predicated region
  $region18: #{gpt_forward.7} parent=0 // pred_check
    _
  $region19: #{gpt_forward.7} parent=0 // pred_check_branch
    %19 = sbr.rel (0) target = $region21
  $region20: #{gpt_forward.7} parent=0 // pred_region
    _
  $region21: #{gpt_forward.7} parent=0 // pred_fallthru
    _
  %v21 = vld [vmem:[%s0] sm:$0xff]
  %v22 = vld [vmem:[%s0 + $0x8] sm:$0xff]
  %v23 = vld [vmem:[%s1] sm:$0x1]
  %v24 = vld [vmem:[%s2] sm:$0x1]
  %vm25 = vcmask 261120
  %v26 = vsel %vm25, %v21, 0.0
  %27 = vadd.xlane.f32.xlu0 %v26
  %v28 = vpop.xlane.xlu0 %27
  %v29 = vsel %vm25, %v22, 0.0
  %30 = vadd.xlane.f32.xlu0 %v29
  %v31 = vpop.xlane.xlu0 %30
  %v32 = vrcp.pop 32.0
  %v33 = vmul.f32 %v28, %v32
  %v34 = vmul.f32 %v31, %v32
  %v35 = vsub.f32 %v21, %v33
  %v36 = vsub.f32 %v22, %v34
  %v37 = vmul.f32 %v35, %v35
  %v38 = vmul.f32 %v36, %v36
  %v39 = vsel %vm25, %v37, 0.0
  %40 = vadd.xlane.f32.xlu0 %v39
  %v41 = vpop.xlane.xlu0 %40
  %v42 = vsel %vm25, %v38, 0.0
  %43 = vadd.xlane.f32.xlu0 %v42
  %v44 = vpop.xlane.xlu0 %43
  %v45 = vmul.f32 %v41, %v32
  %v46 = vmul.f32 %v44, %v32
  %v47 = vadd.f32 %v45, 1e-05
  %v48 = vadd.f32 %v46, 1e-05
  %v49 = vrsqrt.pop %v47
  %v50 = vrsqrt.pop %v48
  %v51 = vmul.f32 %v35, %v49
  %v52 = vmul.f32 %v36, %v50
  %v54 = vlaneseq
  %v55 = vshrl.u32 %v54, 7
  %v56 = vsub.s32 0, %v55
  %v57 = vrot.slane %v23, %v56
  %v59 = vmul.f32 %v51, %v57
  %v60 = vmul.f32 %v52, %v57
  %v62 = vlaneseq
  %v63 = vshrl.u32 %v62, 7
  %v64 = vsub.s32 0, %v63
  %v65 = vrot.slane %v24, %v64
  %v67 = vadd.f32 %v59, %v65
  %v68 = vadd.f32 %v60, %v65
  %v69 = vpack.c.bf16 %v68, %v67
  %v70 = vld [vmem:[%s3] sm:$0xf]
  %v71 = vld [vmem:[%s3 + $0x4] sm:$0xf]
  %v72 = vld [vmem:[%s3 + $0x8] sm:$0xf]
  %v73 = vld [vmem:[%s3 + $0xc] sm:$0xf]
  %v74 = vld [vmem:[%s4] sm:$0x1]
  %v76 = vlaneseq
  %v77 = vshrl.u32 %v76, 7
  %v78 = vsub.s32 0, %v77
  %v79 = vrot.slane %v74, %v78
  %v85 = vunpack.c.l.b16 %v70
  %v86 = vunpack.c.l.b16 %v71
  %v87 = vunpack.c.l.b16 %v72
  %v88 = vunpack.c.l.b16 %v73
  %v89 = vpack.c.b16 %v86, %v85
  %v90 = vpack.c.b16 %v88, %v87
  %v94 = vsel %vm25, %v69, 0
  %96 = vmatprep.subr.bf16.mxu0 0
  %97 = vmatpush1.bf16.msra.mxu0 0
  %98 = vmatprep.subr.bf16.mxu0 0
  %99 = vmatpush1.bf16.msra.mxu0 0
  %100 = vmatprep.subr.bf16.mxu0 0
  %101 = vmatpush1.bf16.msra.mxu0 0
  %102 = vmatprep.subr.bf16.mxu0 0
  %103 = vmatpush1.bf16.msra.mxu0 0
  %104 = vmatprep.subr.bf16.mxu0 0
  %105 = vmatpush1.bf16.msra.mxu0 0
  %106 = vmatprep.subr.bf16.mxu0 0
  %107 = vmatpush1.bf16.msra.mxu0 0
  %108 = vmatprep.subr.bf16.mxu0 0
  %109 = vmatpush1.bf16.msra.mxu0 %v90
  %110 = vmatprep.subr.bf16.mxu0 0
  %111 = vmatpush1.bf16.msra.mxu0 %v89
  %112 = vmatprep.subr.bf16.mxu0 0
  %113 = vmatpush2.bf16.msra.mxu0 0
  %114 = vmatprep.subr.bf16.mxu0 0
  %115 = vmatpush2.bf16.msra.mxu0 0
  %116 = vmatprep.subr.bf16.mxu0 0
  %117 = vmatpush2.bf16.msra.mxu0 0
  %118 = vmatprep.subr.bf16.mxu0 0
  %119 = vmatpush2.bf16.msra.mxu0 0
  %120 = vmatprep.subr.bf16.mxu0 0
  %121 = vmatpush2.bf16.msra.mxu0 0
  %122 = vmatprep.subr.bf16.mxu0 0
  %123 = vmatpush2.bf16.msra.mxu0 0
  %124 = vmatprep.subr.bf16.mxu0 0
  %125 = vmatpush2.bf16.msra.mxu0 0
  %126 = vmatprep.subr.bf16.mxu0 0
  %127 = vmatpush2.bf16.msra.mxu0 0
  %128 = vmatprep.mubr.bf16.mxu0 0
  %129 = vmatmul.mubr.bf16.gmra.mxu0 %v94
  %v130 = vpop.f32.mrf.mxu0
  %v131 = vadd.f32 %v79, %v130
  %v132 = vpop.f32.mrf.mxu0
  %v133 = vpop.f32.mrf.mxu0
  %v134 = vadd.f32 %v79, %v133
  %v135 = vpop.f32.mrf.mxu0
  %136 = vdwg.mxu0
  %v137 = vpack.c.bf16 %v134, %v131
  %v139 = vunpack.c.l.b16 %v137
  %v140 = vunpack.c.h.b16 %v137
  %v141 = vpack.c.b16 %v139, %v139
  %v142 = vpack.c.b16 %v140, %v140
  %vm145 = vcmask 781312
  %146 = vst.msk [vmem:[%s5] sm:$0xf] %vm145, %v141
  %147 = vst.msk [vmem:[%s5 + $0x4] sm:$0xf] %vm145, %v142
  // Predicated region
  $region22: #{gpt_forward.7} parent=0 // pred_check
    _
  $region23: #{gpt_forward.7} parent=0 // pred_check_branch
    %149 = sbr.rel (0) target = $region25
  $region24: #{gpt_forward.7} parent=0 // pred_region
    _
  $region25: #{gpt_forward.7} parent=0 // pred_fallthru
    _
  // Predicated region
  $region26: #{gpt_forward.7} parent=0 // pred_check
    _
  $region27: #{gpt_forward.7} parent=0 // pred_check_branch
    %151 = sbr.rel (0) target = $region29
  $region28: #{gpt_forward.7} parent=0 // pred_region
    _
  $region29: #{gpt_forward.7} parent=0 // pred_fallthru
    _

// kernel: gpt_forward.8
$region0: #{gpt_forward.8}
  #allocation0 [shape = 'u32[]', space=smem, size = 0x4, offset = 0x4, fixed_abs, tag = 'smem constant byte address 0x4 - core index']
  #allocation1 [shape = 'u32[144,128]{1,0:T(1,128)}', space=vmem, size = 0x12000, scoped, tag = 'internal scratch']
  #allocation2 [shape = 'f32[8,1]{1,0:T(8,128)}', space=vmem, size = 0x1000, scoped, tag = 'scratch operand']
  #allocation3 [shape = 'f32[8,1]{1,0:T(8,128)}', space=vmem, size = 0x1000, scoped, tag = 'scratch operand']
  #allocation4 [shape = 'f32[8,8]{1,0:T(8,128)}', space=vmem, size = 0x1000, scoped, tag = 'scratch operand']
  %s0 = inlined_call_operand.vmem [shape: bf16[2,4,8,8], index: 0, kind: input, shape index: {}]
  %s1 = inlined_call_operand.vmem [shape: bf16[2,4,8,8], index: 1, kind: input, shape index: {}]
  %s2 = inlined_call_operand.vmem [shape: bf16[2,4,8,8], index: 2, kind: input, shape index: {}]
  %s3 = inlined_call_operand.vmem [shape: bf16[2,4,8,8], index: 3, kind: output, shape index: {}]
  %s4 = sld [smem:[#allocation0]]
  $region57: #{gpt_forward.8} parent=0
    _
  %s6 = ssub.s32 1, %s4
  %s7 = scalar_select 0, %s6, %s4
  loop: start=0, step=1, limit=10
  $region2: #{gpt_forward.8} parent=0 // loop_pre_header
    _
  $region3: #{gpt_forward.8} parent=0 // loop_header
    %s9 = sphi 0, %s13
    %p10 = scmp.ge.s32.totalorder %s9, 10
    %s16 = sphi 0, %s42
    %s17 = sphi 0, %s38
    %s18 = sphi 0, %s34
    %s19 = sphi 0, %s30
    %s20 = sphi 0, %s16
    %s21 = sphi 0, %s17
    %s22 = sphi 0, %s18
    %s23 = sphi 0, %s19
    %s24 = sphi 0, %s20
    %s25 = sphi 0, %s21
    %s26 = sphi 0, %s22
    %s27 = sphi 0, %s23
    %s49 = sphi 0, %s51
    %s52 = sphi 0, %s49
    %s53 = sphi 0, %s52
    %s69 = sphi 0, %s53
    %s79 = sphi 0, %s81
    %s82 = sphi 0, %s79
    %s83 = sphi 0, %s82
    %s99 = sphi 0, %s83
    %s109 = sphi 0, %s111
    %s112 = sphi 0, %s109
    %s113 = sphi 0, %s112
    %s129 = sphi 0, %s113
    %s139 = sphi 0, %s141
    %s142 = sphi 0, %s139
    %s143 = sphi 0, %s142
    %s159 = sphi 0, %s143
  $region4: #{gpt_forward.8} parent=0 // loop_header_branch
    %12 = sbr.rel (%p10) target = $region8
  $region5: #{gpt_forward.8} parent=0 // loop_body
    %s14 = ssub.s32 %s9, 1
    %s15 = ssub.s32 %s9, 2
    %s28 = sadd.s32 1, %s19
    %p29 = scmp.ge.s32.totalorder %s28, 1
    %s30 = scalar_select %p29, 0, %s28
    %s31 = sadd.s32 1, %s18
    %s32 = scalar_select %p29, %s31, %s18
    %p33 = scmp.ge.s32.totalorder %s32, 1
    %s34 = scalar_select %p33, 0, %s32
    %s35 = sadd.s32 1, %s17
    %s36 = scalar_select %p33, %s35, %s17
    %p37 = scmp.ge.s32.totalorder %s36, 4
    %s38 = scalar_select %p37, 0, %s36
    %s39 = sadd.s32 1, %s16
    %s40 = scalar_select %p37, %s39, %s16
    %p41 = scmp.ge.s32.totalorder %s40, 2
    %s42 = scalar_select %p41, 0, %s40
    %s43 = ssub.s32 %s16, %s42
    %s44 = ssub.s32 %s17, %s38
    %s45 = sor.u32 %s43, %s44
    %s46 = ssub.s32 %s18, %s34
    %s47 = sor.u32 %s45, %s46
    %p48 = scmp.eq.s32.totalorder %s47, 0
    %s50 = sadd.s32 %s49, 1
    %s51 = scalar_select %p48, %s49, %s50
    %p54 = pneg %p48
    %p55 = scmp.eq.s32.totalorder %s9, 7
    %p56 = por %p54, %p55
    %p57 = scmp.ne.s32.totalorder %s49, %s52
    %p58 = scmp.eq.s32.totalorder %s9, 0
    %p59 = por %p57, %p58
    %p60 = scmp.ne.s32.totalorder %s49, %s52
    %p61 = scmp.eq.s32.totalorder %s14, 7
    %p62 = por %p60, %p61
    %p63 = scmp.ne.s32.totalorder %s52, %s53
    %p64 = scmp.eq.s32.totalorder %s14, 0
    %p65 = por %p63, %p64
    %p66 = scmp.ne.s32.totalorder %s52, %s53
    %p67 = scmp.eq.s32.totalorder %s15, 7
    %p68 = por %p66, %p67
    %p70 = scmp.ne.s32.totalorder %s53, %s69
    %p71 = scmp.eq.s32.totalorder %s15, 0
    %p72 = por %p70, %p71
    %s73 = ssub.s32 %s16, %s42
    %s74 = ssub.s32 %s17, %s38
    %s75 = sor.u32 %s73, %s74
    %s76 = ssub.s32 %s19, %s30
    %s77 = sor.u32 %s75, %s76
    %p78 = scmp.eq.s32.totalorder %s77, 0
    %s80 = sadd.s32 %s79, 1
    %s81 = scalar_select %p78, %s79, %s80
    %p84 = pneg %p78
    %p85 = scmp.eq.s32.totalorder %s9, 7
    %p86 = por %p84, %p85
    %p87 = scmp.ne.s32.totalorder %s79, %s82
    %p88 = scmp.eq.s32.totalorder %s9, 0
    %p89 = por %p87, %p88
    %p90 = scmp.ne.s32.totalorder %s79, %s82
    %p91 = scmp.eq.s32.totalorder %s14, 7
    %p92 = por %p90, %p91
    %p93 = scmp.ne.s32.totalorder %s82, %s83
    %p94 = scmp.eq.s32.totalorder %s14, 0
    %p95 = por %p93, %p94
    %p96 = scmp.ne.s32.totalorder %s82, %s83
    %p97 = scmp.eq.s32.totalorder %s15, 7
    %p98 = por %p96, %p97
    %p100 = scmp.ne.s32.totalorder %s83, %s99
    %p101 = scmp.eq.s32.totalorder %s15, 0
    %p102 = por %p100, %p101
    %s103 = ssub.s32 %s16, %s42
    %s104 = ssub.s32 %s17, %s38
    %s105 = sor.u32 %s103, %s104
    %s106 = ssub.s32 %s19, %s30
    %s107 = sor.u32 %s105, %s106
    %p108 = scmp.eq.s32.totalorder %s107, 0
    %s110 = sadd.s32 %s109, 1
    %s111 = scalar_select %p108, %s109, %s110
    %p114 = pneg %p108
    %p115 = scmp.eq.s32.totalorder %s9, 7
    %p116 = por %p114, %p115
    %p117 = scmp.ne.s32.totalorder %s109, %s112
    %p118 = scmp.eq.s32.totalorder %s9, 0
    %p119 = por %p117, %p118
    %p120 = scmp.ne.s32.totalorder %s109, %s112
    %p121 = scmp.eq.s32.totalorder %s14, 7
    %p122 = por %p120, %p121
    %p123 = scmp.ne.s32.totalorder %s112, %s113
    %p124 = scmp.eq.s32.totalorder %s14, 0
    %p125 = por %p123, %p124
    %p126 = scmp.ne.s32.totalorder %s112, %s113
    %p127 = scmp.eq.s32.totalorder %s15, 7
    %p128 = por %p126, %p127
    %p130 = scmp.ne.s32.totalorder %s113, %s129
    %p131 = scmp.eq.s32.totalorder %s15, 0
    %p132 = por %p130, %p131
    %s133 = ssub.s32 %s16, %s42
    %s134 = ssub.s32 %s17, %s38
    %s135 = sor.u32 %s133, %s134
    %s136 = ssub.s32 %s18, %s34
    %s137 = sor.u32 %s135, %s136
    %p138 = scmp.eq.s32.totalorder %s137, 0
    %s140 = sadd.s32 %s139, 1
    %s141 = scalar_select %p138, %s139, %s140
    %p144 = pneg %p138
    %p145 = scmp.eq.s32.totalorder %s9, 7
    %p146 = por %p144, %p145
    %p147 = scmp.ne.s32.totalorder %s139, %s142
    %p148 = scmp.eq.s32.totalorder %s9, 0
    %p149 = por %p147, %p148
    %p150 = scmp.ne.s32.totalorder %s139, %s142
    %p151 = scmp.eq.s32.totalorder %s14, 7
    %p152 = por %p150, %p151
    %p153 = scmp.ne.s32.totalorder %s142, %s143
    %p154 = scmp.eq.s32.totalorder %s14, 0
    %p155 = por %p153, %p154
    %p156 = scmp.ne.s32.totalorder %s142, %s143
    %p157 = scmp.eq.s32.totalorder %s15, 7
    %p158 = por %p156, %p157
    %p160 = scmp.ne.s32.totalorder %s143, %s159
    %p161 = scmp.eq.s32.totalorder %s15, 0
    %p162 = por %p160, %p161
    %p163 = scmp.le.s32.totalorder 1, %s9
    %p164 = scmp.lt.s32.totalorder %s9, 9
    %p165 = pnand %p163, %p164
    %p166 = pneg %p165
    // Predicated region
    $region9: #{gpt_forward.8} parent=5 // pred_check
      _
    $region10: #{gpt_forward.8} parent=5 // pred_check_branch
      %168 = sbr.rel (%p165) target = $region12
    $region11: #{gpt_forward.8} parent=5 // pred_region
      %s169 = ssub.s32 %s9, 1
    $region12: #{gpt_forward.8} parent=5 // pred_fallthru
      _
    %p170 = scmp.lt.s32.totalorder %s9, 8
    // Predicated region
    $region13: #{gpt_forward.8} parent=5 // pred_check
      %p171 = pneg %p170
    $region14: #{gpt_forward.8} parent=5 // pred_check_branch
      %173 = sbr.rel (%p171) target = $region16
    $region15: #{gpt_forward.8} parent=5 // pred_region
      // Predicated region
      $region17: #{gpt_forward.8} parent=15 // pred_check
        %p174 = pneg %p59
      $region18: #{gpt_forward.8} parent=15 // pred_check_branch
        %176 = sbr.rel (%p174) target = $region20
      $region19: #{gpt_forward.8} parent=15 // pred_region
        %p177 = scmp.lt.s32.totalorder %s16, 1
        %s178 = scalar_select %p177, %s16, 1
        %p179 = scmp.lt.s32.totalorder %s17, 3
        %s180 = scalar_select %p179, %s17, 3
        %p181 = scmp.lt.s32.totalorder %s18, 0
        %s182 = scalar_select %p181, %s18, 0
        %s183 = sadd.s32 %s182, %s180
        %s184 = smul.addr %s178, 4
        %s185 = sadd.s32 %s183, %s184
        %s186 = smul.addr %s185, 4
        %s187 = scalar_lea.vmem %s0, %s186
      $region20: #{gpt_forward.8} parent=15 // pred_fallthru
        _
      // Predicated region
      $region21: #{gpt_forward.8} parent=15 // pred_check
        %p188 = pneg %p89
      $region22: #{gpt_forward.8} parent=15 // pred_check_branch
        %190 = sbr.rel (%p188) target = $region24
      $region23: #{gpt_forward.8} parent=15 // pred_region
        %p191 = scmp.lt.s32.totalorder %s16, 1
        %s192 = scalar_select %p191, %s16, 1
        %p193 = scmp.lt.s32.totalorder %s17, 3
        %s194 = scalar_select %p193, %s17, 3
        %p195 = scmp.lt.s32.totalorder %s19, 0
        %s196 = scalar_select %p195, %s19, 0
        %s197 = sadd.s32 %s196, %s194
        %s198 = smul.addr %s192, 4
        %s199 = sadd.s32 %s197, %s198
        %s200 = smul.addr %s199, 4
        %s201 = scalar_lea.vmem %s1, %s200
      $region24: #{gpt_forward.8} parent=15 // pred_fallthru
        _
      // Predicated region
      $region25: #{gpt_forward.8} parent=15 // pred_check
        %p202 = pneg %p119
      $region26: #{gpt_forward.8} parent=15 // pred_check_branch
        %204 = sbr.rel (%p202) target = $region28
      $region27: #{gpt_forward.8} parent=15 // pred_region
        %p205 = scmp.lt.s32.totalorder %s16, 1
        %s206 = scalar_select %p205, %s16, 1
        %p207 = scmp.lt.s32.totalorder %s17, 3
        %s208 = scalar_select %p207, %s17, 3
        %p209 = scmp.lt.s32.totalorder %s19, 0
        %s210 = scalar_select %p209, %s19, 0
        %s211 = sadd.s32 %s210, %s208
        %s212 = smul.addr %s206, 4
        %s213 = sadd.s32 %s211, %s212
        %s214 = smul.addr %s213, 4
        %s215 = scalar_lea.vmem %s2, %s214
      $region28: #{gpt_forward.8} parent=15 // pred_fallthru
        _
    $region16: #{gpt_forward.8} parent=5 // pred_fallthru
      _
    %p216 = scmp.le.s32.totalorder 1, %s9
    %p217 = scmp.lt.s32.totalorder %s9, 9
    %p218 = pnand %p216, %p217
    %p219 = pneg %p218
    // Predicated region
    $region29: #{gpt_forward.8} parent=5 // pred_check
      _
    $region30: #{gpt_forward.8} parent=5 // pred_check_branch
      %221 = sbr.rel (%p218) target = $region32
    $region31: #{gpt_forward.8} parent=5 // pred_region
      %s222 = ssub.s32 %s9, 1
      %p223 = scmp.lt.s32.totalorder %s20, 1
      %s224 = scalar_select %p223, %s20, 1
      %p225 = scmp.lt.s32.totalorder %s21, 3
      %s226 = scalar_select %p225, %s21, 3
      %p227 = scmp.lt.s32.totalorder %s22, 0
      %s228 = scalar_select %p227, %s22, 0
      %s229 = sadd.s32 %s228, %s226
      %s230 = smul.addr %s224, 4
      %s231 = sadd.s32 %s229, %s230
      %s232 = smul.addr %s231, 4
      %s233 = scalar_lea.vmem %s0, %s232
      %p234 = pneg %p65
      %p235 = pneg %p62
      %p236 = scmp.lt.s32.totalorder %s20, 1
      %s237 = scalar_select %p236, %s20, 1
      %p238 = scmp.lt.s32.totalorder %s21, 3
      %s239 = scalar_select %p238, %s21, 3
      %p240 = scmp.lt.s32.totalorder %s23, 0
      %s241 = scalar_select %p240, %s23, 0
      %s242 = sadd.s32 %s241, %s239
      %s243 = smul.addr %s237, 4
      %s244 = sadd.s32 %s242, %s243
      %s245 = smul.addr %s244, 4
      %s246 = scalar_lea.vmem %s1, %s245
      %p247 = pneg %p95
      %p248 = pneg %p92
      %p249 = scmp.lt.s32.totalorder %s20, 1
      %s250 = scalar_select %p249, %s20, 1
      %p251 = scmp.lt.s32.totalorder %s21, 3
      %s252 = scalar_select %p251, %s21, 3
      %p253 = scmp.lt.s32.totalorder %s23, 0
      %s254 = scalar_select %p253, %s23, 0
      %s255 = sadd.s32 %s254, %s252
      %s256 = smul.addr %s250, 4
      %s257 = sadd.s32 %s255, %s256
      %s258 = smul.addr %s257, 4
      %s259 = scalar_lea.vmem %s2, %s258
      %p260 = pneg %p125
      %p261 = pneg %p122
      %p262 = pneg %p155
      %p263 = pneg %p152
      %p264 = scmp.lt.s32.totalorder %s20, 1
      %s265 = scalar_select %p264, %s20, 1
      %p266 = scmp.lt.s32.totalorder %s21, 3
      %s267 = scalar_select %p266, %s21, 3
      %p268 = scmp.lt.s32.totalorder %s22, 0
      %s269 = scalar_select %p268, %s22, 0
      %s270 = sadd.s32 %s269, %s267
      %s271 = smul.addr %s265, 4
      %s272 = sadd.s32 %s270, %s271
      %s273 = smul.addr %s272, 4
      %s274 = scalar_lea.vmem %s3, %s273
      %p275 = scmp.lt.s32.totalorder %s20, 1
      %s276 = scalar_select %p275, %s20, 1
      %p277 = scmp.lt.s32.totalorder %s21, 3
      %s278 = scalar_select %p277, %s21, 3
      %p279 = scmp.lt.s32.totalorder %s22, 0
      %s280 = scalar_select %p279, %s22, 0
      %s281 = sadd.s32 %s280, %s278
      %s282 = smul.addr %s276, 4
      %s283 = sadd.s32 %s281, %s282
      %s284 = smul.addr %s283, 4
      %s285 = scalar_lea.vmem %s0, %s284
      %p286 = scmp.lt.s32.totalorder %s20, 1
      %s287 = scalar_select %p286, %s20, 1
      %p288 = scmp.lt.s32.totalorder %s21, 3
      %s289 = scalar_select %p288, %s21, 3
      %p290 = scmp.lt.s32.totalorder %s23, 0
      %s291 = scalar_select %p290, %s23, 0
      %s292 = sadd.s32 %s291, %s289
      %s293 = smul.addr %s287, 4
      %s294 = sadd.s32 %s292, %s293
      %s295 = smul.addr %s294, 4
      %s296 = scalar_lea.vmem %s1, %s295
      %p297 = scmp.lt.s32.totalorder %s20, 1
      %s298 = scalar_select %p297, %s20, 1
      %p299 = scmp.lt.s32.totalorder %s21, 3
      %s300 = scalar_select %p299, %s21, 3
      %p301 = scmp.lt.s32.totalorder %s23, 0
      %s302 = scalar_select %p301, %s23, 0
      %s303 = sadd.s32 %s302, %s300
      %s304 = smul.addr %s298, 4
      %s305 = sadd.s32 %s303, %s304
      %s306 = smul.addr %s305, 4
      %s307 = scalar_lea.vmem %s2, %s306
      %p308 = scmp.lt.s32.totalorder %s20, 1
      %s309 = scalar_select %p308, %s20, 1
      %p310 = scmp.lt.s32.totalorder %s21, 3
      %s311 = scalar_select %p310, %s21, 3
      %p312 = scmp.lt.s32.totalorder %s22, 0
      %s313 = scalar_select %p312, %s22, 0
      %s314 = sadd.s32 %s313, %s311
      %s315 = smul.addr %s309, 4
      %s316 = sadd.s32 %s314, %s315
      %s317 = smul.addr %s316, 4
      %s318 = scalar_lea.vmem %s3, %s317
      %s320 = smul.u32 %s22, 8
      %s321 = smul.u32 %s23, 8
      %p322 = scmp.eq.s32.totalorder %s23, 0
      // Predicated region
      $region33: #{gpt_forward.8} parent=31 // pred_check
        %p323 = pneg %p322
      $region34: #{gpt_forward.8} parent=31 // pred_check_branch
        %325 = sbr.rel (%p323) target = $region36
      $region35: #{gpt_forward.8} parent=31 // pred_region
        %vm326 = vcmask 7168
        %327 = vst.msk [vmem:[#allocation2] sm:$0xff] %vm326, -inf
        %328 = vst.msk [vmem:[#allocation3] sm:$0xff] %vm326, 0.0
        %vm329 = vcmask 64512
        %330 = vst.msk [vmem:[#allocation4] sm:$0xff] %vm329, 0.0
      $region36: #{gpt_forward.8} parent=31 // pred_fallthru
        _
      %s331 = sadd.s32 %s320, 7
      %p332 = scmp.le.s32.totalorder %s321, %s331
      // Predicated region
      $region37: #{gpt_forward.8} parent=31 // pred_check
        %p333 = pneg %p332
      $region38: #{gpt_forward.8} parent=31 // pred_check_branch
        %335 = sbr.rel (%p333) target = $region40
      $region39: #{gpt_forward.8} parent=31 // pred_region
        %v336 = vld [vmem:[%s285] sm:$0xf]
        %v337 = vld [vmem:[%s296] sm:$0xf]
        %vm338 = vcmask 64512
        %v340 = vsel %vm338, %v336, 0
        %v343 = vsel %vm338, %v337, 0
        %345 = vmatprep.subr.bf16.mxu0 0
        %346 = vmatpush1.bf16.xpose.msra.mxu0 0
        %347 = vmatprep.subr.bf16.mxu0 0
        %348 = vmatpush1.bf16.xpose.msra.mxu0 0
        %349 = vmatprep.subr.bf16.mxu0 0
        %350 = vmatpush1.bf16.xpose.msra.mxu0 0
        %351 = vmatprep.subr.bf16.mxu0 0
        %352 = vmatpush1.bf16.xpose.msra.mxu0 0
        %353 = vmatprep.subr.bf16.mxu0 0
        %354 = vmatpush1.bf16.xpose.msra.mxu0 0
        %355 = vmatprep.subr.bf16.mxu0 0
        %356 = vmatpush1.bf16.xpose.msra.mxu0 0
        %357 = vmatprep.subr.bf16.mxu0 0
        %358 = vmatpush1.bf16.xpose.msra.mxu0 0
        %359 = vmatprep.subr.bf16.mxu0 0
        %360 = vmatpush1.bf16.xpose.msra.mxu0 %v343
        %361 = vmatprep.subr.bf16.mxu0 0
        %362 = vmatpush2.bf16.xpose.msra.mxu0 0
        %363 = vmatprep.subr.bf16.mxu0 0
        %364 = vmatpush2.bf16.xpose.msra.mxu0 0
        %365 = vmatprep.subr.bf16.mxu0 0
        %366 = vmatpush2.bf16.xpose.msra.mxu0 0
        %367 = vmatprep.subr.bf16.mxu0 0
        %368 = vmatpush2.bf16.xpose.msra.mxu0 0
        %369 = vmatprep.subr.bf16.mxu0 0
        %370 = vmatpush2.bf16.xpose.msra.mxu0 0
        %371 = vmatprep.subr.bf16.mxu0 0
        %372 = vmatpush2.bf16.xpose.msra.mxu0 0
        %373 = vmatprep.subr.bf16.mxu0 0
        %374 = vmatpush2.bf16.xpose.msra.mxu0 0
        %375 = vmatprep.subr.bf16.mxu0 0
        %376 = vmatpush2.bf16.xpose.msra.mxu0 0
        %377 = vmatprep.mubr.bf16.mxu0 0
        %378 = vmatmul.mubr.bf16.gmra.mxu0 %v340
        %v379 = vpop.f32.mrf.mxu0
        %v380 = vadd.f32 0.0, %v379
        %v381 = vpop.f32.mrf.mxu0
        %v382 = vpop.f32.mrf.mxu0
        %v383 = vpop.f32.mrf.mxu0
        %384 = vdwg.mxu0
        %v385 = vmul.f32 %v380, 0.35355338
        %v386 = vlaneseq
        %v387 = vshrl.u32 %v386, 7
        %v388 = vstv %s320
        %v389 = vadd.s32 %v388, %v387
        %v390 = vlaneseq
        %v391 = vand.u32 %v390, 127
        %v392 = vstv %s321
        %v393 = vadd.s32 %v392, %v391
        %vm394 = vcmp.ge.s32.totalorder %v389, %v393
        %v395 = vsel %vm394, %v385, -1e+30
        %v396 = vld [vmem:[#allocation2] sm:$0xff]
        %v397 = vsel %vm338, %v395, -inf
        %398 = vmax.xlane.f32.xlu0 %v397
        %v399 = vpop.xlane.xlu0 %398
        %v400 = vmax.f32 %v396, %v399
        %v401 = vsub.f32 %v396, %v400
        %v402 = vmul.f32 %v401, 1.442695
        %v403 = vpow.pop %v402
        %405 = vset.pattern.permute.xlu0 0
        %406 = vperm.xlu0 %405, %v400
        %v407 = vpop.permute.xlu0 %406
        %v409 = vsub.f32 %v395, %v407
        %v410 = vmul.f32 %v409, 1.442695
        %v411 = vpow.pop %v410
        %v412 = vld [vmem:[#allocation3] sm:$0xff]
        %v413 = vmul.f32 %v403, %v412
        %v414 = vsel %vm338, %v411, 0.0
        %415 = vadd.xlane.f32.xlu0 %v414
        %v416 = vpop.xlane.xlu0 %415
        %v417 = vadd.f32 %v413, %v416
        %vm418 = vcmask 7168
        %419 = vst.msk [vmem:[#allocation3] sm:$0xff] %vm418, %v417
        %v420 = vld [vmem:[#allocation4] sm:$0xff]
        %422 = vset.pattern.permute.xlu0 0
        %423 = vperm.xlu0 %422, %v403
        %v424 = vpop.permute.xlu0 %423
        %v426 = vmul.f32 %v424, %v420
        %v427 = vpack.c.bf16 %v411, %v411
        %v428 = vld [vmem:[%s307] sm:$0xf]
        %v430 = vsel %vm338, %v427, 0
        %vm432 = vcmask 1043456
        %v434 = vsel %vm432, %v428, 0
        %436 = vmatprep.subr.bf16.mxu0 0
        %437 = vmatpush1.bf16.msra.mxu0 0
        %438 = vmatprep.subr.bf16.mxu0 0
        %439 = vmatpush1.bf16.msra.mxu0 0
        %440 = vmatprep.subr.bf16.mxu0 0
        %441 = vmatpush1.bf16.msra.mxu0 0
        %442 = vmatprep.subr.bf16.mxu0 0
        %443 = vmatpush1.bf16.msra.mxu0 0
        %444 = vmatprep.subr.bf16.mxu0 0
        %445 = vmatpush1.bf16.msra.mxu0 0
        %446 = vmatprep.subr.bf16.mxu0 0
        %447 = vmatpush1.bf16.msra.mxu0 0
        %448 = vmatprep.subr.bf16.mxu0 0
        %449 = vmatpush1.bf16.msra.mxu0 0
        %450 = vmatprep.subr.bf16.mxu0 0
        %451 = vmatpush1.bf16.msra.mxu0 %v434
        %452 = vmatprep.subr.bf16.mxu0 0
        %453 = vmatpush2.bf16.msra.mxu0 0
        %454 = vmatprep.subr.bf16.mxu0 0
        %455 = vmatpush2.bf16.msra.mxu0 0
        %456 = vmatprep.subr.bf16.mxu0 0
        %457 = vmatpush2.bf16.msra.mxu0 0
        %458 = vmatprep.subr.bf16.mxu0 0
        %459 = vmatpush2.bf16.msra.mxu0 0
        %460 = vmatprep.subr.bf16.mxu0 0
        %461 = vmatpush2.bf16.msra.mxu0 0
        %462 = vmatprep.subr.bf16.mxu0 0
        %463 = vmatpush2.bf16.msra.mxu0 0
        %464 = vmatprep.subr.bf16.mxu0 0
        %465 = vmatpush2.bf16.msra.mxu0 0
        %466 = vmatprep.subr.bf16.mxu0 0
        %467 = vmatpush2.bf16.msra.mxu0 0
        %468 = vmatprep.mubr.bf16.mxu0 0
        %469 = vmatmul.mubr.bf16.gmra.mxu0 %v430
        %v470 = vpop.f32.mrf.mxu0
        %v471 = vadd.f32 0.0, %v470
        %v472 = vpop.f32.mrf.mxu0
        %v473 = vpop.f32.mrf.mxu0
        %v474 = vpop.f32.mrf.mxu0
        %475 = vdwg.mxu0
        %v476 = vadd.f32 %v426, %v471
        %477 = vst.msk [vmem:[#allocation4] sm:$0xff] %vm338, %v476
        %478 = vst.msk [vmem:[#allocation2] sm:$0xff] %vm418, %v400
      $region40: #{gpt_forward.8} parent=31 // pred_fallthru
        _
      // Predicated region
      $region41: #{gpt_forward.8} parent=31 // pred_check
        %p479 = pneg %p322
      $region42: #{gpt_forward.8} parent=31 // pred_check_branch
        %481 = sbr.rel (%p479) target = $region44
      $region43: #{gpt_forward.8} parent=31 // pred_region
        %v482 = vld [vmem:[#allocation4] sm:$0xff]
        %v483 = vld [vmem:[#allocation3] sm:$0xff]
        %v484 = vrcp.pop %v483
        %486 = vset.pattern.permute.xlu0 0
        %487 = vperm.xlu0 %486, %v484
        %v488 = vpop.permute.xlu0 %487
        %v490 = vmul.f32 %v482, %v488
        %v491 = vpack.c.bf16 %v490, %v490
        %vm492 = vcmask 60416
        %493 = vst.msk [vmem:[%s318] sm:$0xf] %vm492, %v491
      $region44: #{gpt_forward.8} parent=31 // pred_fallthru
        _
      %p494 = scmp.lt.s32.totalorder %s20, 1
      %s495 = scalar_select %p494, %s20, 1
      %p496 = scmp.lt.s32.totalorder %s21, 3
      %s497 = scalar_select %p496, %s21, 3
      %p498 = scmp.lt.s32.totalorder %s22, 0
      %s499 = scalar_select %p498, %s22, 0
      %s500 = sadd.s32 %s499, %s497
      %s501 = smul.addr %s495, 4
      %s502 = sadd.s32 %s500, %s501
      %s503 = smul.addr %s502, 4
      %s504 = scalar_lea.vmem %s3, %s503
      // Predicated region
      $region45: #{gpt_forward.8} parent=31 // pred_check
        %p505 = pneg %p152
      $region46: #{gpt_forward.8} parent=31 // pred_check_branch
        %507 = sbr.rel (%p505) target = $region48
      $region47: #{gpt_forward.8} parent=31 // pred_region
        _
      $region48: #{gpt_forward.8} parent=31 // pred_fallthru
        _
    $region32: #{gpt_forward.8} parent=5 // pred_fallthru
      _
    %p508 = scmp.le.s32.totalorder 2, %s9
    // Predicated region
    $region49: #{gpt_forward.8} parent=5 // pred_check
      %p509 = pneg %p508
    $region50: #{gpt_forward.8} parent=5 // pred_check_branch
      %511 = sbr.rel (%p509) target = $region52
    $region51: #{gpt_forward.8} parent=5 // pred_region
      %s512 = ssub.s32 %s9, 2
      // Predicated region
      $region53: #{gpt_forward.8} parent=51 // pred_check
        %p513 = pneg %p158
      $region54: #{gpt_forward.8} parent=51 // pred_check_branch
        %515 = sbr.rel (%p513) target = $region56
      $region55: #{gpt_forward.8} parent=51 // pred_region
        %p516 = scmp.lt.s32.totalorder %s24, 1
        %s517 = scalar_select %p516, %s24, 1
        %p518 = scmp.lt.s32.totalorder %s25, 3
        %s519 = scalar_select %p518, %s25, 3
        %p520 = scmp.lt.s32.totalorder %s26, 0
        %s521 = scalar_select %p520, %s26, 0
        %s522 = sadd.s32 %s521, %s519
        %s523 = smul.addr %s517, 4
        %s524 = sadd.s32 %s522, %s523
        %s525 = smul.addr %s524, 4
        %s526 = scalar_lea.vmem %s3, %s525
      $region56: #{gpt_forward.8} parent=51 // pred_fallthru
        _
    $region52: #{gpt_forward.8} parent=5 // pred_fallthru
      _
  $region6: #{gpt_forward.8} parent=0 // loop_footer
    %s13 = sadd.s32 1, %s9
  $region7: #{gpt_forward.8} parent=0 // loop_footer_branch
    %8 = sbr.rel target = $region3
  $region8: #{gpt_forward.8} parent=0 // loop_exit
    _

// kernel: gpt_forward.13
$region0: #{gpt_forward.13}
  #allocation0 [shape = 'u32[]', space=smem, size = 0x4, offset = 0x4, fixed_abs, tag = 'smem constant byte address 0x4 - core index']
  #allocation1 [shape = 'u32[144,128]{1,0:T(1,128)}', space=vmem, size = 0x12000, scoped, tag = 'internal scratch']
  #allocation2 [shape = 'bf16[1,16,32]{2,1,0:T(8,128)(2,1)}', space=vmem, size = 0x1000, scoped, tag = 'scratch operand']
  #allocation3 [shape = 'f32[16,64]{1,0:T(8,128)}', space=vmem, size = 0x2000, scoped, tag = 'scratch operand']
  %s0 = inlined_call_operand.vmem [shape: f32[16,32], index: 0, kind: input, shape index: {}]
  %s1 = inlined_call_operand.vmem [shape: f32[1,32], index: 1, kind: input, shape index: {}]
  %s2 = inlined_call_operand.vmem [shape: f32[1,32], index: 2, kind: input, shape index: {}]
  %s3 = inlined_call_operand.vmem [shape: bf16[32,64], index: 3, kind: input, shape index: {}]
  %s4 = inlined_call_operand.vmem [shape: f32[1,64], index: 4, kind: input, shape index: {}]
  %s5 = inlined_call_operand.hbm [shape: f32[16,64], index: 5, kind: output, shape index: {}]
  %s6 = sld [smem:[#allocation0]]
  $region42: #{gpt_forward.13} parent=0
    _
  %s8 = ssub.s32 1, %s6
  %s9 = scalar_select 0, %s8, %s6
  $region1: #{gpt_forward.13} parent=0
    #allocation4 [shape = 'u8[8192]{0}', space=vmem, size = 0x2000, scoped, tag = 'output window, operand 0, single buffered']
    #allocation5 [shape = 's32[1]{0}', space=sflag, size = 0x4, scoped, tag = 'scoped memory for gpt_forward.13']
    %10 = vsyncpa [#allocation5], 0
    // Predicated region
    $region2: #{gpt_forward.13} parent=1 // pred_check
      _
    $region3: #{gpt_forward.13} parent=1 // pred_check_branch
      %12 = sbr.rel (0) target = $region5
    $region4: #{gpt_forward.13} parent=1 // pred_region
      _
    $region5: #{gpt_forward.13} parent=1 // pred_fallthru
      _
    // Predicated region
    $region6: #{gpt_forward.13} parent=1 // pred_check
      _
    $region7: #{gpt_forward.13} parent=1 // pred_check_branch
      %14 = sbr.rel (0) target = $region9
    $region8: #{gpt_forward.13} parent=1 // pred_region
      _
    $region9: #{gpt_forward.13} parent=1 // pred_fallthru
      _
    // Predicated region
    $region10: #{gpt_forward.13} parent=1 // pred_check
      _
    $region11: #{gpt_forward.13} parent=1 // pred_check_branch
      %16 = sbr.rel (0) target = $region13
    $region12: #{gpt_forward.13} parent=1 // pred_region
      _
    $region13: #{gpt_forward.13} parent=1 // pred_fallthru
      _
    // Predicated region
    $region14: #{gpt_forward.13} parent=1 // pred_check
      _
    $region15: #{gpt_forward.13} parent=1 // pred_check_branch
      %18 = sbr.rel (0) target = $region17
    $region16: #{gpt_forward.13} parent=1 // pred_region
      _
    $region17: #{gpt_forward.13} parent=1 // pred_fallthru
      _
    // Predicated region
    $region18: #{gpt_forward.13} parent=1 // pred_check
      _
    $region19: #{gpt_forward.13} parent=1 // pred_check_branch
      %20 = sbr.rel (0) target = $region21
    $region20: #{gpt_forward.13} parent=1 // pred_region
      _
    $region21: #{gpt_forward.13} parent=1 // pred_fallthru
      _
    %p22 = scmp.eq.s32.totalorder 0, 0
    %p23 = scmp.eq.s32.totalorder 0, 0
    %p24 = pnand %p22, %p23
    %p25 = pneg %p24
    // Predicated region
    $region22: #{gpt_forward.13} parent=1 // pred_check
      _
    $region23: #{gpt_forward.13} parent=1 // pred_check_branch
      %27 = sbr.rel (%p24) target = $region25
    $region24: #{gpt_forward.13} parent=1 // pred_region
      %v28 = vld [vmem:[%s0] sm:$0xff]
      %v29 = vld [vmem:[%s0 + $0x8] sm:$0xff]
      %v30 = vld [vmem:[%s1] sm:$0x1]
      %v31 = vld [vmem:[%s2] sm:$0x1]
      %vm32 = vcmask 261120
      %v33 = vsel %vm32, %v28, 0.0
      %34 = vadd.xlane.f32.xlu0 %v33
      %v35 = vpop.xlane.xlu0 %34
      %v36 = vsel %vm32, %v29, 0.0
      %37 = vadd.xlane.f32.xlu0 %v36
      %v38 = vpop.xlane.xlu0 %37
      %v39 = vrcp.pop 32.0
      %v40 = vmul.f32 %v35, %v39
      %v41 = vmul.f32 %v38, %v39
      %v42 = vsub.f32 %v28, %v40
      %v43 = vsub.f32 %v29, %v41
      %v44 = vmul.f32 %v42, %v42
      %v45 = vmul.f32 %v43, %v43
      %v46 = vsel %vm32, %v44, 0.0
      %47 = vadd.xlane.f32.xlu0 %v46
      %v48 = vpop.xlane.xlu0 %47
      %v49 = vsel %vm32, %v45, 0.0
      %50 = vadd.xlane.f32.xlu0 %v49
      %v51 = vpop.xlane.xlu0 %50
      %v52 = vmul.f32 %v48, %v39
      %v53 = vmul.f32 %v51, %v39
      %v54 = vadd.f32 %v52, 1e-05
      %v55 = vadd.f32 %v53, 1e-05
      %v56 = vrsqrt.pop %v54
      %v57 = vrsqrt.pop %v55
      %v58 = vmul.f32 %v42, %v56
      %v59 = vmul.f32 %v43, %v57
      %v61 = vlaneseq
      %v62 = vshrl.u32 %v61, 7
      %v63 = vsub.s32 0, %v62
      %v64 = vrot.slane %v30, %v63
      %v66 = vmul.f32 %v58, %v64
      %v67 = vmul.f32 %v59, %v64
      %v69 = vlaneseq
      %v70 = vshrl.u32 %v69, 7
      %v71 = vsub.s32 0, %v70
      %v72 = vrot.slane %v31, %v71
      %v74 = vadd.f32 %v66, %v72
      %v75 = vadd.f32 %v67, %v72
      %v76 = vpack.c.bf16 %v75, %v74
      %v78 = vunpack.c.l.b16 %v76
      %v79 = vunpack.c.h.b16 %v76
      %v80 = vpack.c.b16 %v78, %v78
      %v81 = vpack.c.b16 %v79, %v79
      %vm84 = vcmask 257024
      %85 = vst.msk [vmem:[#allocation2] sm:$0xf] %vm84, %v80
      %86 = vst.msk [vmem:[#allocation2 + $0x4] sm:$0xf] %vm84, %v81
    $region25: #{gpt_forward.13} parent=1 // pred_fallthru
      _
    // Predicated region
    $region26: #{gpt_forward.13} parent=1 // pred_check
      %p87 = pneg %p23
    $region27: #{gpt_forward.13} parent=1 // pred_check_branch
      %89 = sbr.rel (%p87) target = $region29
    $region28: #{gpt_forward.13} parent=1 // pred_region
      %vm90 = vcmask 523264
      %91 = vst.msk [vmem:[#allocation3] sm:$0xff] %vm90, 0.0
      %92 = vst.msk [vmem:[#allocation3 + $0x8] sm:$0xff] %vm90, 0.0
    $region29: #{gpt_forward.13} parent=1 // pred_fallthru
      _
    %v93 = vld [vmem:[#allocation3] sm:$0xff]
    %v94 = vld [vmem:[#allocation3 + $0x8] sm:$0xff]
    %s95 = smul.u32 0, 2
    %s96 = smul.addr %s95, 4
    %s97 = scalar_lea.vmem [#allocation2], %s96
    %v98 = vld [vmem:[%s97] sm:$0xf]
    %v99 = vld [vmem:[%s97 + $0x4] sm:$0xf]
    %v100 = vld [vmem:[%s3] sm:$0xf]
    %v101 = vld [vmem:[%s3 + $0x4] sm:$0xf]
    %v102 = vld [vmem:[%s3 + $0x8] sm:$0xf]
    %v103 = vld [vmem:[%s3 + $0xc] sm:$0xf]
    %v106 = vunpack.c.l.b16 %v98
    %v107 = vunpack.c.l.b16 %v99
    %v108 = vpack.c.b16 %v107, %v106
    %v113 = vunpack.c.l.b16 %v100
    %v114 = vunpack.c.l.b16 %v101
    %v115 = vunpack.c.l.b16 %v102
    %v116 = vunpack.c.l.b16 %v103
    %v117 = vpack.c.b16 %v114, %v113
    %v118 = vpack.c.b16 %v116, %v115
    %vm121 = vcmask 261120
    %v123 = vsel %vm121, %v108, 0
    %125 = vmatprep.subr.bf16.mxu0 0
    %126 = vmatpush1.bf16.msra.mxu0 0
    %127 = vmatprep.subr.bf16.mxu0 0
    %128 = vmatpush1.bf16.msra.mxu0 0
    %129 = vmatprep.subr.bf16.mxu0 0
    %130 = vmatpush1.bf16.msra.mxu0 0
    %131 = vmatprep.subr.bf16.mxu0 0
    %132 = vmatpush1.bf16.msra.mxu0 0
    %133 = vmatprep.subr.bf16.mxu0 0
    %134 = vmatpush1.bf16.msra.mxu0 0
    %135 = vmatprep.subr.bf16.mxu0 0
    %136 = vmatpush1.bf16.msra.mxu0 0
    %137 = vmatprep.subr.bf16.mxu0 0
    %138 = vmatpush1.bf16.msra.mxu0 %v118
    %139 = vmatprep.subr.bf16.mxu0 0
    %140 = vmatpush1.bf16.msra.mxu0 %v117
    %141 = vmatprep.subr.bf16.mxu0 0
    %142 = vmatpush2.bf16.msra.mxu0 0
    %143 = vmatprep.subr.bf16.mxu0 0
    %144 = vmatpush2.bf16.msra.mxu0 0
    %145 = vmatprep.subr.bf16.mxu0 0
    %146 = vmatpush2.bf16.msra.mxu0 0
    %147 = vmatprep.subr.bf16.mxu0 0
    %148 = vmatpush2.bf16.msra.mxu0 0
    %149 = vmatprep.subr.bf16.mxu0 0
    %150 = vmatpush2.bf16.msra.mxu0 0
    %151 = vmatprep.subr.bf16.mxu0 0
    %152 = vmatpush2.bf16.msra.mxu0 0
    %153 = vmatprep.subr.bf16.mxu0 0
    %154 = vmatpush2.bf16.msra.mxu0 0
    %155 = vmatprep.subr.bf16.mxu0 0
    %156 = vmatpush2.bf16.msra.mxu0 0
    %157 = vmatprep.mubr.bf16.mxu0 0
    %158 = vmatmul.mubr.bf16.gmra.mxu0 %v123
    %v159 = vpop.f32.mrf.mxu0
    %v160 = vadd.f32 0.0, %v159
    %v161 = vpop.f32.mrf.mxu0
    %v162 = vpop.f32.mrf.mxu0
    %v163 = vadd.f32 0.0, %v162
    %v164 = vpop.f32.mrf.mxu0
    %165 = vdwg.mxu0
    %v166 = vadd.f32 %v93, %v160
    %v167 = vadd.f32 %v94, %v163
    %vm168 = vcmask 523264
    %169 = vst.msk [vmem:[#allocation3] sm:$0xff] %vm168, %v166
    %170 = vst.msk [vmem:[#allocation3 + $0x8] sm:$0xff] %vm168, %v167
    // Predicated region
    $region30: #{gpt_forward.13} parent=1 // pred_check
      %p171 = pneg %p23
    $region31: #{gpt_forward.13} parent=1 // pred_check_branch
      %173 = sbr.rel (%p171) target = $region33
    $region32: #{gpt_forward.13} parent=1 // pred_region
      %v174 = vld [vmem:[#allocation3] sm:$0xff]
      %v175 = vld [vmem:[#allocation3 + $0x8] sm:$0xff]
      %v176 = vld [vmem:[%s4] sm:$0x1]
      %v178 = vlaneseq
      %v179 = vshrl.u32 %v178, 7
      %v180 = vsub.s32 0, %v179
      %v181 = vrot.slane %v176, %v180
      %v183 = vadd.f32 %v174, %v181
      %v184 = vadd.f32 %v175, %v181
      %185 = vst.msk [vmem:[#allocation4] sm:$0xff] %vm168, %v183
      %186 = vst.msk [vmem:[#allocation4 + $0x8] sm:$0xff] %vm168, %v184
    $region33: #{gpt_forward.13} parent=1 // pred_fallthru
      _
    // Predicated region
    $region34: #{gpt_forward.13} parent=1 // pred_check
      _
    $region35: #{gpt_forward.13} parent=1 // pred_check_branch
      %188 = sbr.rel (0) target = $region37
    $region36: #{gpt_forward.13} parent=1 // pred_region
      %s190 = ssub.s32 256, 256
      %191 = vsyncadd [#allocation5], %s190
      %s192 = sshll.u32 [#allocation4], 4
      %s193 = int_to_ptr.vmem [resolvable:$true] %s192
      %198 = dma.vmem_to_hbm [thread:$0]  %s193, 256, %s5, [#allocation5], 128, 128, 8
    $region37: #{gpt_forward.13} parent=1 // pred_fallthru
      _
    // Predicated region
    $region38: #{gpt_forward.13} parent=1 // pred_check
      _
    $region39: #{gpt_forward.13} parent=1 // pred_check_branch
      %200 = sbr.rel (0) target = $region41
    $region40: #{gpt_forward.13} parent=1 // pred_region
      %201 = dma.done [#allocation5], 256
    $region41: #{gpt_forward.13} parent=1 // pred_fallthru
      _
    %202 = vsyncpa [#allocation5], 1

// kernel: gpt_forward.9
$region0: #{gpt_forward.9}
  #allocation0 [shape = 'u32[]', space=smem, size = 0x4, offset = 0x4, fixed_abs, tag = 'smem constant byte address 0x4 - core index']
  #allocation1 [shape = 'u32[144,128]{1,0:T(1,128)}', space=vmem, size = 0x12000, scoped, tag = 'internal scratch']
  #allocation2 [shape = 'f32[16,32]{1,0:T(8,128)}', space=vmem, size = 0x2000, scoped, tag = 'scratch operand']
  #allocation3 [shape = 'bf16[16,32]{1,0:T(8,128)(2,1)}', space=vmem, size = 0x1000, scoped, tag = 'scratch operand']
  #allocation4 [shape = 'f32[16,32]{1,0:T(8,128)}', space=vmem, size = 0x2000, scoped, tag = 'scratch operand']
  %s0 = inlined_call_operand.vmem [shape: f32[16,32], index: 0, kind: input, shape index: {}, may-alias: {0,10}]
  %s1 = inlined_call_operand.vmem [shape: bf16[16,32], index: 1, kind: input, shape index: {}]
  %s2 = inlined_call_operand.vmem [shape: bf16[32,32], index: 2, kind: input, shape index: {}]
  %s3 = inlined_call_operand.vmem [shape: f32[1,32], index: 3, kind: input, shape index: {}]
  %s4 = inlined_call_operand.vmem [shape: f32[1,32], index: 4, kind: input, shape index: {}]
  %s5 = inlined_call_operand.vmem [shape: f32[1,32], index: 5, kind: input, shape index: {}]
  %s6 = inlined_call_operand.vmem [shape: bf16[32,64], index: 6, kind: input, shape index: {}]
  %s7 = inlined_call_operand.vmem [shape: f32[1,64], index: 7, kind: input, shape index: {}]
  %s8 = inlined_call_operand.vmem [shape: bf16[64,32], index: 8, kind: input, shape index: {}]
  %s9 = inlined_call_operand.vmem [shape: f32[1,32], index: 9, kind: input, shape index: {}]
  %s10 = inlined_call_operand.vmem [shape: f32[16,32], index: 10, kind: output, shape index: {}, may-alias: {0,10}]
  %s11 = sld [smem:[#allocation0]]
  $region58: #{gpt_forward.9} parent=0
    _
  %s13 = ssub.s32 1, %s11
  %s14 = scalar_select 0, %s13, %s11
  // Predicated region
  $region2: #{gpt_forward.9} parent=0 // pred_check
    _
  $region3: #{gpt_forward.9} parent=0 // pred_check_branch
    %16 = sbr.rel (0) target = $region5
  $region4: #{gpt_forward.9} parent=0 // pred_region
    _
  $region5: #{gpt_forward.9} parent=0 // pred_fallthru
    _
  // Predicated region
  $region6: #{gpt_forward.9} parent=0 // pred_check
    _
  $region7: #{gpt_forward.9} parent=0 // pred_check_branch
    %18 = sbr.rel (0) target = $region9
  $region8: #{gpt_forward.9} parent=0 // pred_region
    _
  $region9: #{gpt_forward.9} parent=0 // pred_fallthru
    _
  // Predicated region
  $region10: #{gpt_forward.9} parent=0 // pred_check
    _
  $region11: #{gpt_forward.9} parent=0 // pred_check_branch
    %20 = sbr.rel (0) target = $region13
  $region12: #{gpt_forward.9} parent=0 // pred_region
    _
  $region13: #{gpt_forward.9} parent=0 // pred_fallthru
    _
  // Predicated region
  $region14: #{gpt_forward.9} parent=0 // pred_check
    _
  $region15: #{gpt_forward.9} parent=0 // pred_check_branch
    %22 = sbr.rel (0) target = $region17
  $region16: #{gpt_forward.9} parent=0 // pred_region
    _
  $region17: #{gpt_forward.9} parent=0 // pred_fallthru
    _
  // Predicated region
  $region18: #{gpt_forward.9} parent=0 // pred_check
    _
  $region19: #{gpt_forward.9} parent=0 // pred_check_branch
    %24 = sbr.rel (0) target = $region21
  $region20: #{gpt_forward.9} parent=0 // pred_region
    _
  $region21: #{gpt_forward.9} parent=0 // pred_fallthru
    _
  // Predicated region
  $region22: #{gpt_forward.9} parent=0 // pred_check
    _
  $region23: #{gpt_forward.9} parent=0 // pred_check_branch
    %26 = sbr.rel (0) target = $region25
  $region24: #{gpt_forward.9} parent=0 // pred_region
    _
  $region25: #{gpt_forward.9} parent=0 // pred_fallthru
    _
  // Predicated region
  $region26: #{gpt_forward.9} parent=0 // pred_check
    _
  $region27: #{gpt_forward.9} parent=0 // pred_check_branch
    %28 = sbr.rel (0) target = $region29
  $region28: #{gpt_forward.9} parent=0 // pred_region
    _
  $region29: #{gpt_forward.9} parent=0 // pred_fallthru
    _
  // Predicated region
  $region30: #{gpt_forward.9} parent=0 // pred_check
    _
  $region31: #{gpt_forward.9} parent=0 // pred_check_branch
    %30 = sbr.rel (0) target = $region33
  $region32: #{gpt_forward.9} parent=0 // pred_region
    _
  $region33: #{gpt_forward.9} parent=0 // pred_fallthru
    _
  // Predicated region
  $region34: #{gpt_forward.9} parent=0 // pred_check
    _
  $region35: #{gpt_forward.9} parent=0 // pred_check_branch
    %32 = sbr.rel (0) target = $region37
  $region36: #{gpt_forward.9} parent=0 // pred_region
    _
  $region37: #{gpt_forward.9} parent=0 // pred_fallthru
    _
  // Predicated region
  $region38: #{gpt_forward.9} parent=0 // pred_check
    _
  $region39: #{gpt_forward.9} parent=0 // pred_check_branch
    %34 = sbr.rel (0) target = $region41
  $region40: #{gpt_forward.9} parent=0 // pred_region
    _
  $region41: #{gpt_forward.9} parent=0 // pred_fallthru
    _
  %p36 = scmp.eq.s32.totalorder 0, 0
  // Predicated region
  $region42: #{gpt_forward.9} parent=0 // pred_check
    %p37 = pneg %p36
  $region43: #{gpt_forward.9} parent=0 // pred_check_branch
    %39 = sbr.rel (%p37) target = $region45
  $region44: #{gpt_forward.9} parent=0 // pred_region
    %v40 = vld [vmem:[%s0] sm:$0xff]
    %v41 = vld [vmem:[%s0 + $0x8] sm:$0xff]
    %v42 = vld [vmem:[%s1] sm:$0xf]
    %v43 = vld [vmem:[%s1 + $0x4] sm:$0xf]
    %v44 = vld [vmem:[%s2] sm:$0xf]
    %v45 = vld [vmem:[%s2 + $0x4] sm:$0xf]
    %v46 = vld [vmem:[%s2 + $0x8] sm:$0xf]
    %v47 = vld [vmem:[%s2 + $0xc] sm:$0xf]
    %v48 = vld [vmem:[%s3] sm:$0x1]
    %v50 = vlaneseq
    %v51 = vshrl.u32 %v50, 7
    %v52 = vsub.s32 0, %v51
    %v53 = vrot.slane %v48, %v52
    %v57 = vunpack.c.l.b16 %v42
    %v58 = vunpack.c.l.b16 %v43
    %v59 = vpack.c.b16 %v58, %v57
    %v64 = vunpack.c.l.b16 %v44
    %v65 = vunpack.c.l.b16 %v45
    %v66 = vunpack.c.l.b16 %v46
    %v67 = vunpack.c.l.b16 %v47
    %v68 = vpack.c.b16 %v65, %v64
    %v69 = vpack.c.b16 %v67, %v66
    %vm72 = vcmask 261120
    %v74 = vsel %vm72, %v59, 0
    %76 = vmatprep.subr.bf16.mxu0 0
    %77 = vmatpush1.bf16.msra.mxu0 0
    %78 = vmatprep.subr.bf16.mxu0 0
    %79 = vmatpush1.bf16.msra.mxu0 0
    %80 = vmatprep.subr.bf16.mxu0 0
    %81 = vmatpush1.bf16.msra.mxu0 0
    %82 = vmatprep.subr.bf16.mxu0 0
    %83 = vmatpush1.bf16.msra.mxu0 0
    %84 = vmatprep.subr.bf16.mxu0 0
    %85 = vmatpush1.bf16.msra.mxu0 0
    %86 = vmatprep.subr.bf16.mxu0 0
    %87 = vmatpush1.bf16.msra.mxu0 0
    %88 = vmatprep.subr.bf16.mxu0 0
    %89 = vmatpush1.bf16.msra.mxu0 %v69
    %90 = vmatprep.subr.bf16.mxu0 0
    %91 = vmatpush1.bf16.msra.mxu0 %v68
    %92 = vmatprep.subr.bf16.mxu0 0
    %93 = vmatpush2.bf16.msra.mxu0 0
    %94 = vmatprep.subr.bf16.mxu0 0
    %95 = vmatpush2.bf16.msra.mxu0 0
    %96 = vmatprep.subr.bf16.mxu0 0
    %97 = vmatpush2.bf16.msra.mxu0 0
    %98 = vmatprep.subr.bf16.mxu0 0
    %99 = vmatpush2.bf16.msra.mxu0 0
    %100 = vmatprep.subr.bf16.mxu0 0
    %101 = vmatpush2.bf16.msra.mxu0 0
    %102 = vmatprep.subr.bf16.mxu0 0
    %103 = vmatpush2.bf16.msra.mxu0 0
    %104 = vmatprep.subr.bf16.mxu0 0
    %105 = vmatpush2.bf16.msra.mxu0 0
    %106 = vmatprep.subr.bf16.mxu0 0
    %107 = vmatpush2.bf16.msra.mxu0 0
    %108 = vmatprep.mubr.bf16.mxu0 0
    %109 = vmatmul.mubr.bf16.gmra.mxu0 %v74
    %v110 = vpop.f32.mrf.mxu0
    %v111 = vadd.f32 %v53, %v110
    %v112 = vpop.f32.mrf.mxu0
    %v113 = vpop.f32.mrf.mxu0
    %v114 = vadd.f32 %v53, %v113
    %v115 = vpop.f32.mrf.mxu0
    %116 = vdwg.mxu0
    %v117 = vadd.f32 %v40, %v111
    %v118 = vadd.f32 %v41, %v114
    %119 = vst.msk [vmem:[#allocation2] sm:$0xff] %vm72, %v117
    %120 = vst.msk [vmem:[#allocation2 + $0x8] sm:$0xff] %vm72, %v118
    %v121 = vld [vmem:[%s4] sm:$0x1]
    %v122 = vld [vmem:[%s5] sm:$0x1]
    %v123 = vsel %vm72, %v117, 0.0
    %124 = vadd.xlane.f32.xlu0 %v123
    %v125 = vpop.xlane.xlu0 %124
    %v126 = vsel %vm72, %v118, 0.0
    %127 = vadd.xlane.f32.xlu0 %v126
    %v128 = vpop.xlane.xlu0 %127
    %v129 = vrcp.pop 32.0
    %v130 = vmul.f32 %v125, %v129
    %v131 = vmul.f32 %v128, %v129
    %v132 = vsub.f32 %v117, %v130
    %v133 = vsub.f32 %v118, %v131
    %v134 = vmul.f32 %v132, %v132
    %v135 = vmul.f32 %v133, %v133
    %v136 = vsel %vm72, %v134, 0.0
    %137 = vadd.xlane.f32.xlu0 %v136
    %v138 = vpop.xlane.xlu0 %137
    %v139 = vsel %vm72, %v135, 0.0
    %140 = vadd.xlane.f32.xlu0 %v139
    %v141 = vpop.xlane.xlu0 %140
    %v142 = vmul.f32 %v138, %v129
    %v143 = vmul.f32 %v141, %v129
    %v144 = vadd.f32 %v142, 1e-05
    %v145 = vadd.f32 %v143, 1e-05
    %v146 = vrsqrt.pop %v144
    %v147 = vrsqrt.pop %v145
    %v148 = vmul.f32 %v132, %v146
    %v149 = vmul.f32 %v133, %v147
    %v151 = vlaneseq
    %v152 = vshrl.u32 %v151, 7
    %v153 = vsub.s32 0, %v152
    %v154 = vrot.slane %v121, %v153
    %v156 = vmul.f32 %v148, %v154
    %v157 = vmul.f32 %v149, %v154
    %v159 = vlaneseq
    %v160 = vshrl.u32 %v159, 7
    %v161 = vsub.s32 0, %v160
    %v162 = vrot.slane %v122, %v161
    %v164 = vadd.f32 %v156, %v162
    %v165 = vadd.f32 %v157, %v162
    %v166 = vpack.c.bf16 %v165, %v164
    %v168 = vunpack.c.l.b16 %v166
    %v169 = vunpack.c.h.b16 %v166
    %v170 = vpack.c.b16 %v168, %v168
    %v171 = vpack.c.b16 %v169, %v169
    %vm174 = vcmask 257024
    %175 = vst.msk [vmem:[#allocation3] sm:$0xf] %vm174, %v170
    %176 = vst.msk [vmem:[#allocation3 + $0x4] sm:$0xf] %vm174, %v171
    %177 = vst.msk [vmem:[#allocation4] sm:$0xff] %vm72, 0.0
    %178 = vst.msk [vmem:[#allocation4 + $0x8] sm:$0xff] %vm72, 0.0
  $region45: #{gpt_forward.9} parent=0 // pred_fallthru
    _
  %v179 = vld [vmem:[#allocation3] sm:$0xf]
  %v180 = vld [vmem:[#allocation3 + $0x4] sm:$0xf]
  %v181 = vld [vmem:[%s6] sm:$0xf]
  %v182 = vld [vmem:[%s6 + $0x4] sm:$0xf]
  %v183 = vld [vmem:[%s6 + $0x8] sm:$0xf]
  %v184 = vld [vmem:[%s6 + $0xc] sm:$0xf]
  %v185 = vld [vmem:[%s7] sm:$0x1]
  %v187 = vlaneseq
  %v188 = vshrl.u32 %v187, 7
  %v189 = vsub.s32 0, %v188
  %v190 = vrot.slane %v185, %v189
  %v194 = vunpack.c.l.b16 %v179
  %v195 = vunpack.c.l.b16 %v180
  %v196 = vpack.c.b16 %v195, %v194
  %v201 = vunpack.c.l.b16 %v181
  %v202 = vunpack.c.l.b16 %v182
  %v203 = vunpack.c.l.b16 %v183
  %v204 = vunpack.c.l.b16 %v184
  %v205 = vpack.c.b16 %v202, %v201
  %v206 = vpack.c.b16 %v204, %v203
  %vm209 = vcmask 261120
  %v211 = vsel %vm209, %v196, 0
  %213 = vmatprep.subr.bf16.mxu0 0
  %214 = vmatpush1.bf16.msra.mxu0 0
  %215 = vmatprep.subr.bf16.mxu0 0
  %216 = vmatpush1.bf16.msra.mxu0 0
  %217 = vmatprep.subr.bf16.mxu0 0
  %218 = vmatpush1.bf16.msra.mxu0 0
  %219 = vmatprep.subr.bf16.mxu0 0
  %220 = vmatpush1.bf16.msra.mxu0 0
  %221 = vmatprep.subr.bf16.mxu0 0
  %222 = vmatpush1.bf16.msra.mxu0 0
  %223 = vmatprep.subr.bf16.mxu0 0
  %224 = vmatpush1.bf16.msra.mxu0 0
  %225 = vmatprep.subr.bf16.mxu0 0
  %226 = vmatpush1.bf16.msra.mxu0 %v206
  %227 = vmatprep.subr.bf16.mxu0 0
  %228 = vmatpush1.bf16.msra.mxu0 %v205
  %229 = vmatprep.subr.bf16.mxu0 0
  %230 = vmatpush2.bf16.msra.mxu0 0
  %231 = vmatprep.subr.bf16.mxu0 0
  %232 = vmatpush2.bf16.msra.mxu0 0
  %233 = vmatprep.subr.bf16.mxu0 0
  %234 = vmatpush2.bf16.msra.mxu0 0
  %235 = vmatprep.subr.bf16.mxu0 0
  %236 = vmatpush2.bf16.msra.mxu0 0
  %237 = vmatprep.subr.bf16.mxu0 0
  %238 = vmatpush2.bf16.msra.mxu0 0
  %239 = vmatprep.subr.bf16.mxu0 0
  %240 = vmatpush2.bf16.msra.mxu0 0
  %241 = vmatprep.subr.bf16.mxu0 0
  %242 = vmatpush2.bf16.msra.mxu0 0
  %243 = vmatprep.subr.bf16.mxu0 0
  %244 = vmatpush2.bf16.msra.mxu0 0
  %245 = vmatprep.mubr.bf16.mxu0 0
  %246 = vmatmul.mubr.bf16.gmra.mxu0 %v211
  %v247 = vpop.f32.mrf.mxu0
  %v248 = vadd.f32 %v190, %v247
  %v249 = vpop.f32.mrf.mxu0
  %v250 = vpop.f32.mrf.mxu0
  %v251 = vadd.f32 %v190, %v250
  %v252 = vpop.f32.mrf.mxu0
  %253 = vdwg.mxu0
  %v254 = vmul.f32 %v248, 0.5
  %v255 = vmul.f32 %v251, 0.5
  %v256 = vmul.f32 %v248, 0.044715
  %v257 = vmul.f32 %v251, 0.044715
  %v258 = vmul.f32 %v256, %v248
  %v259 = vmul.f32 %v257, %v251
  %v260 = vmul.f32 %v258, %v248
  %v261 = vmul.f32 %v259, %v251
  %v262 = vadd.f32 %v248, %v260
  %v263 = vadd.f32 %v251, %v261
  %v264 = vmul.f32 %v262, 0.7978846
  %v265 = vmul.f32 %v263, 0.7978846
  %v266 = vtanh.pop %v264
  %v267 = vtanh.pop %v265
  %v268 = vadd.f32 %v266, 1.0
  %v269 = vadd.f32 %v267, 1.0
  %v270 = vmul.f32 %v254, %v268
  %v271 = vmul.f32 %v255, %v269
  %v272 = vld [vmem:[#allocation4] sm:$0xff]
  %v273 = vld [vmem:[#allocation4 + $0x8] sm:$0xff]
  %v274 = vpack.c.bf16 %v271, %v270
  %v275 = vld [vmem:[%s8] sm:$0xf]
  %v276 = vld [vmem:[%s8 + $0x4] sm:$0xf]
  %v277 = vld [vmem:[%s8 + $0x8] sm:$0xf]
  %v278 = vld [vmem:[%s8 + $0xc] sm:$0xf]
  %v279 = vld [vmem:[%s8 + $0x10] sm:$0xf]
  %v280 = vld [vmem:[%s8 + $0x14] sm:$0xf]
  %v281 = vld [vmem:[%s8 + $0x18] sm:$0xf]
  %v282 = vld [vmem:[%s8 + $0x1c] sm:$0xf]
  %v291 = vunpack.c.l.b16 %v275
  %v292 = vunpack.c.l.b16 %v276
  %v293 = vunpack.c.l.b16 %v277
  %v294 = vunpack.c.l.b16 %v278
  %v295 = vunpack.c.l.b16 %v279
  %v296 = vunpack.c.l.b16 %v280
  %v297 = vunpack.c.l.b16 %v281
  %v298 = vunpack.c.l.b16 %v282
  %v299 = vpack.c.b16 %v292, %v291
  %v300 = vpack.c.b16 %v294, %v293
  %v301 = vpack.c.b16 %v296, %v295
  %v302 = vpack.c.b16 %v298, %v297
  %vm307 = vcmask 523264
  %v309 = vsel %vm307, %v274, 0
  %311 = vmatprep.subr.bf16.mxu0 0
  %312 = vmatpush1.bf16.msra.mxu0 0
  %313 = vmatprep.subr.bf16.mxu0 0
  %314 = vmatpush1.bf16.msra.mxu0 0
  %315 = vmatprep.subr.bf16.mxu0 0
  %316 = vmatpush1.bf16.msra.mxu0 0
  %317 = vmatprep.subr.bf16.mxu0 0
  %318 = vmatpush1.bf16.msra.mxu0 0
  %319 = vmatprep.subr.bf16.mxu0 0
  %320 = vmatpush1.bf16.msra.mxu0 %v302
  %321 = vmatprep.subr.bf16.mxu0 0
  %322 = vmatpush1.bf16.msra.mxu0 %v301
  %323 = vmatprep.subr.bf16.mxu0 0
  %324 = vmatpush1.bf16.msra.mxu0 %v300
  %325 = vmatprep.subr.bf16.mxu0 0
  %326 = vmatpush1.bf16.msra.mxu0 %v299
  %327 = vmatprep.subr.bf16.mxu0 0
  %328 = vmatpush2.bf16.msra.mxu0 0
  %329 = vmatprep.subr.bf16.mxu0 0
  %330 = vmatpush2.bf16.msra.mxu0 0
  %331 = vmatprep.subr.bf16.mxu0 0
  %332 = vmatpush2.bf16.msra.mxu0 0
  %333 = vmatprep.subr.bf16.mxu0 0
  %334 = vmatpush2.bf16.msra.mxu0 0
  %335 = vmatprep.subr.bf16.mxu0 0
  %336 = vmatpush2.bf16.msra.mxu0 0
  %337 = vmatprep.subr.bf16.mxu0 0
  %338 = vmatpush2.bf16.msra.mxu0 0
  %339 = vmatprep.subr.bf16.mxu0 0
  %340 = vmatpush2.bf16.msra.mxu0 0
  %341 = vmatprep.subr.bf16.mxu0 0
  %342 = vmatpush2.bf16.msra.mxu0 0
  %343 = vmatprep.mubr.bf16.mxu0 0
  %344 = vmatmul.mubr.bf16.gmra.mxu0 %v309
  %v345 = vpop.f32.mrf.mxu0
  %v346 = vadd.f32 0.0, %v345
  %v347 = vpop.f32.mrf.mxu0
  %v348 = vpop.f32.mrf.mxu0
  %v349 = vadd.f32 0.0, %v348
  %v350 = vpop.f32.mrf.mxu0
  %351 = vdwg.mxu0
  %v352 = vadd.f32 %v272, %v346
  %v353 = vadd.f32 %v273, %v349
  %354 = vst.msk [vmem:[#allocation4] sm:$0xff] %vm209, %v352
  %355 = vst.msk [vmem:[#allocation4 + $0x8] sm:$0xff] %vm209, %v353
  // Predicated region
  $region46: #{gpt_forward.9} parent=0 // pred_check
    %p356 = pneg %p36
  $region47: #{gpt_forward.9} parent=0 // pred_check_branch
    %358 = sbr.rel (%p356) target = $region49
  $region48: #{gpt_forward.9} parent=0 // pred_region
    %v359 = vld [vmem:[#allocation2] sm:$0xff]
    %v360 = vld [vmem:[#allocation2 + $0x8] sm:$0xff]
    %v361 = vld [vmem:[#allocation4] sm:$0xff]
    %v362 = vld [vmem:[#allocation4 + $0x8] sm:$0xff]
    %v363 = vadd.f32 %v359, %v361
    %v364 = vadd.f32 %v360, %v362
    %v365 = vld [vmem:[%s9] sm:$0x1]
    %v367 = vlaneseq
    %v368 = vshrl.u32 %v367, 7
    %v369 = vsub.s32 0, %v368
    %v370 = vrot.slane %v365, %v369
    %v372 = vadd.f32 %v363, %v370
    %v373 = vadd.f32 %v364, %v370
    %374 = vst.msk [vmem:[%s10] sm:$0xff] %vm209, %v372
    %375 = vst.msk [vmem:[%s10 + $0x8] sm:$0xff] %vm209, %v373
  $region49: #{gpt_forward.9} parent=0 // pred_fallthru
    _
  // Predicated region
  $region50: #{gpt_forward.9} parent=0 // pred_check
    _
  $region51: #{gpt_forward.9} parent=0 // pred_check_branch
    %377 = sbr.rel (0) target = $region53
  $region52: #{gpt_forward.9} parent=0 // pred_region
    _
  $region53: #{gpt_forward.9} parent=0 // pred_fallthru
    _
  // Predicated region
  $region54: #{gpt_forward.9} parent=0 // pred_check
    _
  $region55: #{gpt_forward.9} parent=0 // pred_check_branch
    %379 = sbr.rel (0) target = $region57
  $region56: #{gpt_forward.9} parent=0 // pred_region
    _
  $region57: #{gpt_forward.9} parent=0 // pred_fallthru
    _

</llo_original>
